<compile_context>
chip_gen: v5e
topology: v5e:2x2
jax: 0.10.0
libtpu: 0.0.40
codegen_flags: <defaults>
</compile_context>

<pallas_src>
import jax
import jax.numpy as jnp
from jax.experimental import pallas as pl
from jax.experimental.pallas import tpu as pltpu  # noqa: F401


def lstm_fc_kernel(x_ref, wih0_ref, whh0_ref, b0_ref,
                   wihs_ref, whhs_ref, bs_ref,
                   fcw_ref, fcb_ref,
                   out_ref):
    TB, I = x_ref.shape                      # x passed time-major, flattened to (T*B, I)
    H = whh0_ref.shape[0]
    B = out_ref.shape[0]
    T = TB // B
    num_extra = wihs_ref.shape[0]            # num_layers - 1

    def cell(gx_t, h, c, w_hh):
        # gx_t already contains x_t @ W_ih^T + (b_ih + b_hh); only the recurrent
        # matmul and the nonlinearities are on this layer's serial chain.
        gates = gx_t + jnp.dot(h, w_hh, preferred_element_type=jnp.float32)   # (B, 4H)
        sig = jax.nn.sigmoid(gates)          # one full-vreg EUP op -> i, f, o
        th = jnp.tanh(gates)                 # one full-vreg EUP op -> g
        i_g = sig[:, 0 * H:1 * H]
        f_g = sig[:, 1 * H:2 * H]
        g_g = th[:, 2 * H:3 * H]
        o_g = sig[:, 3 * H:4 * H]
        c_new = f_g * c + i_g * g_g
        h_new = o_g * jnp.tanh(c_new)
        return h_new, c_new

    zeros = jnp.zeros((B, H), jnp.float32)

    # ---- layer 0: input projection hoisted out of the recurrence ----
    if I == 1:
        # input_size == 1: (T*B,1) * (1,4H) broadcast == x @ W_ih^T for all t.
        gx0 = x_ref[...] * wih0_ref[...] + b0_ref[...]                         # (T*B, 4H)
    else:
        gx0 = (jnp.dot(x_ref[...], wih0_ref[...],
                       preferred_element_type=jnp.float32) + b0_ref[...])      # (T*B, 4H)

    whh0 = whh0_ref[...]
    h, c = zeros, zeros
    hs = []                                   # per-step outputs kept as values (no scratch)
    for t in range(T):                        # fully unrolled (T static)
        h, c = cell(gx0[t * B:(t + 1) * B, :], h, c, whh0)
        hs.append(h)

    # ---- layers 1 .. num_layers-1 (H -> H): per-step input projections so layer
    # l+1 at time t only depends on layer l at time t (wavefront DAG, no barrier). ----
    for layer in range(num_extra):            # static layer loop
        w_ih = wihs_ref[layer]                # (H, 4H)
        w_hh = whhs_ref[layer]                # (H, 4H)
        b = bs_ref[layer]                     # (1, 4H)
        last = (layer == num_extra - 1)
        h, c = zeros, zeros
        next_hs = []
        for t in range(T):                    # fully unrolled
            gx = jnp.dot(hs[t], w_ih, preferred_element_type=jnp.float32) + b
            h, c = cell(gx, h, c, w_hh)
            if not last:
                next_hs.append(h)
        hs = next_hs
        # Top layer: only its final h is needed (carried in registers).

    # ---- fc on the final hidden state of the top layer ----
    out_ref[...] = (jnp.dot(h, fcw_ref[...], preferred_element_type=jnp.float32)
                    + fcb_ref[...])


def lstm_model_forward(x, params):
    """x: (B, T, I) batch-first, float32. Returns (B, 1)."""
    B, T, I = x.shape
    # Time-major, flattened to 2-D (lane-friendly; avoids a (T,B,1) 3-D layout).
    x_tm = jnp.transpose(x, (1, 0, 2)).reshape(T * B, I).astype(jnp.float32)
    # Single program, no grid: everything (weights + activations) fits in VMEM at
    # these shapes, and a grid would only add ~0.35us/step of loop overhead.
    return pl.pallas_call(
        lstm_fc_kernel,
        out_shape=jax.ShapeDtypeStruct((B, 1), jnp.float32),
    )(x_tm,
      params["wih0"], params["whh0"], params["b0"],
      params["wihs"], params["whhs"], params["bs"],
      params["fcw"], params["fcb"])


def init_params(key, input_size=1, hidden_size=32, num_layers=3):
    """Deterministic synthetic weights, PyTorch-style uniform(-1/sqrt(H), 1/sqrt(H)).

    Stored pre-transposed relative to PyTorch:
      wih0: (I, 4H), whh0: (H, 4H), b0: (1, 4H) = bias_ih + bias_hh
      wihs/whhs: (L-1, H, 4H), bs: (L-1, 1, 4H)
      fcw: (H, 1), fcb: (1, 1)
    Gate column order matches PyTorch: [i | f | g | o].
    """
    H = hidden_size
    k = 1.0 / jnp.sqrt(jnp.float32(H))
    ks = jax.random.split(key, 10)

    def u(kk, shape):
        return jax.random.uniform(kk, shape, jnp.float32, -k, k)

    params = {
        "wih0": u(ks[0], (input_size, 4 * H)),
        "whh0": u(ks[1], (H, 4 * H)),
        "b0":   u(ks[2], (1, 4 * H)) + u(ks[3], (1, 4 * H)),
        "wihs": u(ks[4], (num_layers - 1, H, 4 * H)),
        "whhs": u(ks[5], (num_layers - 1, H, 4 * H)),
        "bs":   u(ks[6], (num_layers - 1, 1, 4 * H)) + u(ks[7], (num_layers - 1, 1, 4 * H)),
        "fcw":  u(ks[8], (H, 1)),
        "fcb":  u(ks[9], (1, 1)),
    }
    return params


def reference_forward(x, params):
    """Pure-JAX reference matching PyTorch nn.LSTM (inference) + fc semantics."""
    B, T, _ = x.shape
    H = params["whh0"].shape[0]
    num_layers = params["wihs"].shape[0] + 1
    seq = x.astype(jnp.float32)
    for layer in range(num_layers):
        if layer == 0:
            wih, whh, b = params["wih0"], params["whh0"], params["b0"]
        else:
            wih = params["wihs"][layer - 1]
            whh = params["whhs"][layer - 1]
            b = params["bs"][layer - 1]
        h = jnp.zeros((B, H), jnp.float32)
        c = jnp.zeros((B, H), jnp.float32)
        outs = []
        for t in range(T):
            gates = seq[:, t, :] @ wih + h @ whh + b
            i = jax.nn.sigmoid(gates[:, 0 * H:1 * H])
            f = jax.nn.sigmoid(gates[:, 1 * H:2 * H])
            g = jnp.tanh(gates[:, 2 * H:3 * H])
            o = jax.nn.sigmoid(gates[:, 3 * H:4 * H])
            c = f * c + i * g
            h = o * jnp.tanh(c)
            outs.append(h)
        seq = jnp.stack(outs, axis=1)
    return seq[:, -1, :] @ params["fcw"] + params["fcb"]


if __name__ == "__main__":
    B, T, I, H, L = 2, 8, 1, 32, 3
    key = jax.random.PRNGKey(0)
    kx, kp = jax.random.split(key)
    x = jax.random.normal(kx, (B, T, I), jnp.float32)
    params = init_params(kp, input_size=I, hidden_size=H, num_layers=L)

    out = lstm_model_forward(x, params)
    out = jax.block_until_ready(out)

    ref = reference_forward(x, params)
    assert out.shape == (B, 1)
    assert jnp.allclose(out, ref, atol=1e-4, rtol=1e-4), (out, ref)

    print("KERNEL_OK")
</pallas_src>

<mosaic_0001>
module attributes {stable_mosaic.version = 11 : i64} {
  func.func @lstm_fc_kernel(%arg0: memref<16x1xf32, #tpu.memory_space<vmem>>, %arg1: memref<1x128xf32, #tpu.memory_space<vmem>>, %arg2: memref<32x128xf32, #tpu.memory_space<vmem>>, %arg3: memref<1x128xf32, #tpu.memory_space<vmem>>, %arg4: memref<2x32x128xf32, #tpu.memory_space<vmem>>, %arg5: memref<2x32x128xf32, #tpu.memory_space<vmem>>, %arg6: memref<2x1x128xf32, #tpu.memory_space<vmem>>, %arg7: memref<32x1xf32, #tpu.memory_space<vmem>>, %arg8: memref<1x1xf32, #tpu.memory_space<vmem>>, %arg9: memref<2x1xf32, #tpu.memory_space<vmem>>) attributes {dimension_semantics = [], scalar_prefetch = 0 : i64, scratch_operands = 0 : i64, tpu.core_type = #tpu.core_type<tc>} {
    %cst = arith.constant 0.000000e+00 : f32
    %0 = vector.broadcast %cst : f32 to vector<2x32xf32>
    %c0 = arith.constant 0 : index
    %c0_0 = arith.constant 0 : index
    %1 = vector.load %arg0[%c0, %c0_0] : memref<16x1xf32, #tpu.memory_space<vmem>>, vector<16x1xf32>
    %c0_1 = arith.constant 0 : index
    %c0_2 = arith.constant 0 : index
    %2 = vector.load %arg1[%c0_1, %c0_2] : memref<1x128xf32, #tpu.memory_space<vmem>>, vector<1x128xf32>
    %3 = vector.broadcast %1 : vector<16x1xf32> to vector<16x128xf32>
    %4 = vector.broadcast %2 : vector<1x128xf32> to vector<16x128xf32>
    %5 = arith.mulf %3, %4 : vector<16x128xf32>
    %c0_3 = arith.constant 0 : index
    %c0_4 = arith.constant 0 : index
    %6 = vector.load %arg3[%c0_3, %c0_4] : memref<1x128xf32, #tpu.memory_space<vmem>>, vector<1x128xf32>
    %7 = vector.broadcast %6 : vector<1x128xf32> to vector<16x128xf32>
    %8 = arith.addf %5, %7 : vector<16x128xf32>
    %c0_5 = arith.constant 0 : index
    %c0_6 = arith.constant 0 : index
    %9 = vector.load %arg2[%c0_5, %c0_6] : memref<32x128xf32, #tpu.memory_space<vmem>>, vector<32x128xf32>
    %10 = vector.extract_strided_slice %8 {offsets = [0, 0], sizes = [2, 128], strides = [1, 1]} : vector<16x128xf32> to vector<2x128xf32>
    %cst_7 = arith.constant dense<0.000000e+00> : vector<2x128xf32>
    %11 = tpu.matmul %0, %9, %cst_7 {dimension_numbers = #tpu.dot_dimension_numbers<[1], [0], [0], [1], [0, 0, 1, 1], [], []>} : vector<2x32xf32>, vector<32x128xf32>, vector<2x128xf32> -> vector<2x128xf32>
    %12 = arith.addf %10, %11 : vector<2x128xf32>
    %13 = arith.negf %12 : vector<2x128xf32>
    %14 = math.exp %13 : vector<2x128xf32>
    %cst_8 = arith.constant 1.000000e+00 : f32
    %15 = vector.broadcast %cst_8 : f32 to vector<2x128xf32>
    %16 = arith.addf %15, %14 : vector<2x128xf32>
    %17 = arith.divf %15, %16 : vector<2x128xf32>
    %18 = math.tanh %12 : vector<2x128xf32>
    %19 = vector.extract_strided_slice %17 {offsets = [0, 0], sizes = [2, 32], strides = [1, 1]} : vector<2x128xf32> to vector<2x32xf32>
    %20 = vector.extract_strided_slice %17 {offsets = [0, 32], sizes = [2, 32], strides = [1, 1]} : vector<2x128xf32> to vector<2x32xf32>
    %21 = vector.extract_strided_slice %18 {offsets = [0, 64], sizes = [2, 32], strides = [1, 1]} : vector<2x128xf32> to vector<2x32xf32>
    %22 = vector.extract_strided_slice %17 {offsets = [0, 96], sizes = [2, 32], strides = [1, 1]} : vector<2x128xf32> to vector<2x32xf32>
    %23 = arith.mulf %20, %0 : vector<2x32xf32>
    %24 = arith.mulf %19, %21 : vector<2x32xf32>
    %25 = arith.addf %23, %24 : vector<2x32xf32>
    %26 = math.tanh %25 : vector<2x32xf32>
    %27 = arith.mulf %22, %26 : vector<2x32xf32>
    %28 = vector.extract_strided_slice %8 {offsets = [2, 0], sizes = [2, 128], strides = [1, 1]} : vector<16x128xf32> to vector<2x128xf32>
    %cst_9 = arith.constant dense<0.000000e+00> : vector<2x128xf32>
    %29 = tpu.matmul %27, %9, %cst_9 {dimension_numbers = #tpu.dot_dimension_numbers<[1], [0], [0], [1], [0, 0, 1, 1], [], []>} : vector<2x32xf32>, vector<32x128xf32>, vector<2x128xf32> -> vector<2x128xf32>
    %30 = arith.addf %28, %29 : vector<2x128xf32>
    %31 = arith.negf %30 : vector<2x128xf32>
    %32 = math.exp %31 : vector<2x128xf32>
    %cst_10 = arith.constant 1.000000e+00 : f32
    %33 = vector.broadcast %cst_10 : f32 to vector<2x128xf32>
    %34 = arith.addf %33, %32 : vector<2x128xf32>
    %35 = arith.divf %33, %34 : vector<2x128xf32>
    %36 = math.tanh %30 : vector<2x128xf32>
    %37 = vector.extract_strided_slice %35 {offsets = [0, 0], sizes = [2, 32], strides = [1, 1]} : vector<2x128xf32> to vector<2x32xf32>
    %38 = vector.extract_strided_slice %35 {offsets = [0, 32], sizes = [2, 32], strides = [1, 1]} : vector<2x128xf32> to vector<2x32xf32>
    %39 = vector.extract_strided_slice %36 {offsets = [0, 64], sizes = [2, 32], strides = [1, 1]} : vector<2x128xf32> to vector<2x32xf32>
    %40 = vector.extract_strided_slice %35 {offsets = [0, 96], sizes = [2, 32], strides = [1, 1]} : vector<2x128xf32> to vector<2x32xf32>
    %41 = arith.mulf %38, %25 : vector<2x32xf32>
    %42 = arith.mulf %37, %39 : vector<2x32xf32>
    %43 = arith.addf %41, %42 : vector<2x32xf32>
    %44 = math.tanh %43 : vector<2x32xf32>
    %45 = arith.mulf %40, %44 : vector<2x32xf32>
    %46 = vector.extract_strided_slice %8 {offsets = [4, 0], sizes = [2, 128], strides = [1, 1]} : vector<16x128xf32> to vector<2x128xf32>
    %cst_11 = arith.constant dense<0.000000e+00> : vector<2x128xf32>
    %47 = tpu.matmul %45, %9, %cst_11 {dimension_numbers = #tpu.dot_dimension_numbers<[1], [0], [0], [1], [0, 0, 1, 1], [], []>} : vector<2x32xf32>, vector<32x128xf32>, vector<2x128xf32> -> vector<2x128xf32>
    %48 = arith.addf %46, %47 : vector<2x128xf32>
    %49 = arith.negf %48 : vector<2x128xf32>
    %50 = math.exp %49 : vector<2x128xf32>
    %cst_12 = arith.constant 1.000000e+00 : f32
    %51 = vector.broadcast %cst_12 : f32 to vector<2x128xf32>
    %52 = arith.addf %51, %50 : vector<2x128xf32>
    %53 = arith.divf %51, %52 : vector<2x128xf32>
    %54 = math.tanh %48 : vector<2x128xf32>
    %55 = vector.extract_strided_slice %53 {offsets = [0, 0], sizes = [2, 32], strides = [1, 1]} : vector<2x128xf32> to vector<2x32xf32>
    %56 = vector.extract_strided_slice %53 {offsets = [0, 32], sizes = [2, 32], strides = [1, 1]} : vector<2x128xf32> to vector<2x32xf32>
    %57 = vector.extract_strided_slice %54 {offsets = [0, 64], sizes = [2, 32], strides = [1, 1]} : vector<2x128xf32> to vector<2x32xf32>
    %58 = vector.extract_strided_slice %53 {offsets = [0, 96], sizes = [2, 32], strides = [1, 1]} : vector<2x128xf32> to vector<2x32xf32>
    %59 = arith.mulf %56, %43 : vector<2x32xf32>
    %60 = arith.mulf %55, %57 : vector<2x32xf32>
    %61 = arith.addf %59, %60 : vector<2x32xf32>
    %62 = math.tanh %61 : vector<2x32xf32>
    %63 = arith.mulf %58, %62 : vector<2x32xf32>
    %64 = vector.extract_strided_slice %8 {offsets = [6, 0], sizes = [2, 128], strides = [1, 1]} : vector<16x128xf32> to vector<2x128xf32>
    %cst_13 = arith.constant dense<0.000000e+00> : vector<2x128xf32>
    %65 = tpu.matmul %63, %9, %cst_13 {dimension_numbers = #tpu.dot_dimension_numbers<[1], [0], [0], [1], [0, 0, 1, 1], [], []>} : vector<2x32xf32>, vector<32x128xf32>, vector<2x128xf32> -> vector<2x128xf32>
    %66 = arith.addf %64, %65 : vector<2x128xf32>
    %67 = arith.negf %66 : vector<2x128xf32>
    %68 = math.exp %67 : vector<2x128xf32>
    %cst_14 = arith.constant 1.000000e+00 : f32
    %69 = vector.broadcast %cst_14 : f32 to vector<2x128xf32>
    %70 = arith.addf %69, %68 : vector<2x128xf32>
    %71 = arith.divf %69, %70 : vector<2x128xf32>
    %72 = math.tanh %66 : vector<2x128xf32>
    %73 = vector.extract_strided_slice %71 {offsets = [0, 0], sizes = [2, 32], strides = [1, 1]} : vector<2x128xf32> to vector<2x32xf32>
    %74 = vector.extract_strided_slice %71 {offsets = [0, 32], sizes = [2, 32], strides = [1, 1]} : vector<2x128xf32> to vector<2x32xf32>
    %75 = vector.extract_strided_slice %72 {offsets = [0, 64], sizes = [2, 32], strides = [1, 1]} : vector<2x128xf32> to vector<2x32xf32>
    %76 = vector.extract_strided_slice %71 {offsets = [0, 96], sizes = [2, 32], strides = [1, 1]} : vector<2x128xf32> to vector<2x32xf32>
    %77 = arith.mulf %74, %61 : vector<2x32xf32>
    %78 = arith.mulf %73, %75 : vector<2x32xf32>
    %79 = arith.addf %77, %78 : vector<2x32xf32>
    %80 = math.tanh %79 : vector<2x32xf32>
    %81 = arith.mulf %76, %80 : vector<2x32xf32>
    %82 = vector.extract_strided_slice %8 {offsets = [8, 0], sizes = [2, 128], strides = [1, 1]} : vector<16x128xf32> to vector<2x128xf32>
    %cst_15 = arith.constant dense<0.000000e+00> : vector<2x128xf32>
    %83 = tpu.matmul %81, %9, %cst_15 {dimension_numbers = #tpu.dot_dimension_numbers<[1], [0], [0], [1], [0, 0, 1, 1], [], []>} : vector<2x32xf32>, vector<32x128xf32>, vector<2x128xf32> -> vector<2x128xf32>
    %84 = arith.addf %82, %83 : vector<2x128xf32>
    %85 = arith.negf %84 : vector<2x128xf32>
    %86 = math.exp %85 : vector<2x128xf32>
    %cst_16 = arith.constant 1.000000e+00 : f32
    %87 = vector.broadcast %cst_16 : f32 to vector<2x128xf32>
    %88 = arith.addf %87, %86 : vector<2x128xf32>
    %89 = arith.divf %87, %88 : vector<2x128xf32>
    %90 = math.tanh %84 : vector<2x128xf32>
    %91 = vector.extract_strided_slice %89 {offsets = [0, 0], sizes = [2, 32], strides = [1, 1]} : vector<2x128xf32> to vector<2x32xf32>
    %92 = vector.extract_strided_slice %89 {offsets = [0, 32], sizes = [2, 32], strides = [1, 1]} : vector<2x128xf32> to vector<2x32xf32>
    %93 = vector.extract_strided_slice %90 {offsets = [0, 64], sizes = [2, 32], strides = [1, 1]} : vector<2x128xf32> to vector<2x32xf32>
    %94 = vector.extract_strided_slice %89 {offsets = [0, 96], sizes = [2, 32], strides = [1, 1]} : vector<2x128xf32> to vector<2x32xf32>
    %95 = arith.mulf %92, %79 : vector<2x32xf32>
    %96 = arith.mulf %91, %93 : vector<2x32xf32>
    %97 = arith.addf %95, %96 : vector<2x32xf32>
    %98 = math.tanh %97 : vector<2x32xf32>
    %99 = arith.mulf %94, %98 : vector<2x32xf32>
    %100 = vector.extract_strided_slice %8 {offsets = [10, 0], sizes = [2, 128], strides = [1, 1]} : vector<16x128xf32> to vector<2x128xf32>
    %cst_17 = arith.constant dense<0.000000e+00> : vector<2x128xf32>
    %101 = tpu.matmul %99, %9, %cst_17 {dimension_numbers = #tpu.dot_dimension_numbers<[1], [0], [0], [1], [0, 0, 1, 1], [], []>} : vector<2x32xf32>, vector<32x128xf32>, vector<2x128xf32> -> vector<2x128xf32>
    %102 = arith.addf %100, %101 : vector<2x128xf32>
    %103 = arith.negf %102 : vector<2x128xf32>
    %104 = math.exp %103 : vector<2x128xf32>
    %cst_18 = arith.constant 1.000000e+00 : f32
    %105 = vector.broadcast %cst_18 : f32 to vector<2x128xf32>
    %106 = arith.addf %105, %104 : vector<2x128xf32>
    %107 = arith.divf %105, %106 : vector<2x128xf32>
    %108 = math.tanh %102 : vector<2x128xf32>
    %109 = vector.extract_strided_slice %107 {offsets = [0, 0], sizes = [2, 32], strides = [1, 1]} : vector<2x128xf32> to vector<2x32xf32>
    %110 = vector.extract_strided_slice %107 {offsets = [0, 32], sizes = [2, 32], strides = [1, 1]} : vector<2x128xf32> to vector<2x32xf32>
    %111 = vector.extract_strided_slice %108 {offsets = [0, 64], sizes = [2, 32], strides = [1, 1]} : vector<2x128xf32> to vector<2x32xf32>
    %112 = vector.extract_strided_slice %107 {offsets = [0, 96], sizes = [2, 32], strides = [1, 1]} : vector<2x128xf32> to vector<2x32xf32>
    %113 = arith.mulf %110, %97 : vector<2x32xf32>
    %114 = arith.mulf %109, %111 : vector<2x32xf32>
    %115 = arith.addf %113, %114 : vector<2x32xf32>
    %116 = math.tanh %115 : vector<2x32xf32>
    %117 = arith.mulf %112, %116 : vector<2x32xf32>
    %118 = vector.extract_strided_slice %8 {offsets = [12, 0], sizes = [2, 128], strides = [1, 1]} : vector<16x128xf32> to vector<2x128xf32>
    %cst_19 = arith.constant dense<0.000000e+00> : vector<2x128xf32>
    %119 = tpu.matmul %117, %9, %cst_19 {dimension_numbers = #tpu.dot_dimension_numbers<[1], [0], [0], [1], [0, 0, 1, 1], [], []>} : vector<2x32xf32>, vector<32x128xf32>, vector<2x128xf32> -> vector<2x128xf32>
    %120 = arith.addf %118, %119 : vector<2x128xf32>
    %121 = arith.negf %120 : vector<2x128xf32>
    %122 = math.exp %121 : vector<2x128xf32>
    %cst_20 = arith.constant 1.000000e+00 : f32
    %123 = vector.broadcast %cst_20 : f32 to vector<2x128xf32>
    %124 = arith.addf %123, %122 : vector<2x128xf32>
    %125 = arith.divf %123, %124 : vector<2x128xf32>
    %126 = math.tanh %120 : vector<2x128xf32>
    %127 = vector.extract_strided_slice %125 {offsets = [0, 0], sizes = [2, 32], strides = [1, 1]} : vector<2x128xf32> to vector<2x32xf32>
    %128 = vector.extract_strided_slice %125 {offsets = [0, 32], sizes = [2, 32], strides = [1, 1]} : vector<2x128xf32> to vector<2x32xf32>
    %129 = vector.extract_strided_slice %126 {offsets = [0, 64], sizes = [2, 32], strides = [1, 1]} : vector<2x128xf32> to vector<2x32xf32>
    %130 = vector.extract_strided_slice %125 {offsets = [0, 96], sizes = [2, 32], strides = [1, 1]} : vector<2x128xf32> to vector<2x32xf32>
    %131 = arith.mulf %128, %115 : vector<2x32xf32>
    %132 = arith.mulf %127, %129 : vector<2x32xf32>
    %133 = arith.addf %131, %132 : vector<2x32xf32>
    %134 = math.tanh %133 : vector<2x32xf32>
    %135 = arith.mulf %130, %134 : vector<2x32xf32>
    %136 = vector.extract_strided_slice %8 {offsets = [14, 0], sizes = [2, 128], strides = [1, 1]} : vector<16x128xf32> to vector<2x128xf32>
    %cst_21 = arith.constant dense<0.000000e+00> : vector<2x128xf32>
    %137 = tpu.matmul %135, %9, %cst_21 {dimension_numbers = #tpu.dot_dimension_numbers<[1], [0], [0], [1], [0, 0, 1, 1], [], []>} : vector<2x32xf32>, vector<32x128xf32>, vector<2x128xf32> -> vector<2x128xf32>
    %138 = arith.addf %136, %137 : vector<2x128xf32>
    %139 = arith.negf %138 : vector<2x128xf32>
    %140 = math.exp %139 : vector<2x128xf32>
    %cst_22 = arith.constant 1.000000e+00 : f32
    %141 = vector.broadcast %cst_22 : f32 to vector<2x128xf32>
    %142 = arith.addf %141, %140 : vector<2x128xf32>
    %143 = arith.divf %141, %142 : vector<2x128xf32>
    %144 = math.tanh %138 : vector<2x128xf32>
    %145 = vector.extract_strided_slice %143 {offsets = [0, 0], sizes = [2, 32], strides = [1, 1]} : vector<2x128xf32> to vector<2x32xf32>
    %146 = vector.extract_strided_slice %143 {offsets = [0, 32], sizes = [2, 32], strides = [1, 1]} : vector<2x128xf32> to vector<2x32xf32>
    %147 = vector.extract_strided_slice %144 {offsets = [0, 64], sizes = [2, 32], strides = [1, 1]} : vector<2x128xf32> to vector<2x32xf32>
    %148 = vector.extract_strided_slice %143 {offsets = [0, 96], sizes = [2, 32], strides = [1, 1]} : vector<2x128xf32> to vector<2x32xf32>
    %149 = arith.mulf %146, %133 : vector<2x32xf32>
    %150 = arith.mulf %145, %147 : vector<2x32xf32>
    %151 = arith.addf %149, %150 : vector<2x32xf32>
    %152 = math.tanh %151 : vector<2x32xf32>
    %153 = arith.mulf %148, %152 : vector<2x32xf32>
    %c0_23 = arith.constant 0 : index
    %c0_24 = arith.constant 0 : index
    %c0_25 = arith.constant 0 : index
    %154 = vector.load %arg4[%c0_23, %c0_24, %c0_25] : memref<2x32x128xf32, #tpu.memory_space<vmem>>, vector<1x32x128xf32>
    %155 = vector.shape_cast %154 : vector<1x32x128xf32> to vector<32x128xf32>
    %c0_26 = arith.constant 0 : index
    %c0_27 = arith.constant 0 : index
    %c0_28 = arith.constant 0 : index
    %156 = vector.load %arg5[%c0_26, %c0_27, %c0_28] : memref<2x32x128xf32, #tpu.memory_space<vmem>>, vector<1x32x128xf32>
    %157 = vector.shape_cast %156 : vector<1x32x128xf32> to vector<32x128xf32>
    %c0_29 = arith.constant 0 : index
    %c0_30 = arith.constant 0 : index
    %c0_31 = arith.constant 0 : index
    %158 = vector.load %arg6[%c0_29, %c0_30, %c0_31] : memref<2x1x128xf32, #tpu.memory_space<vmem>>, vector<1x1x128xf32>
    %159 = vector.shape_cast %158 : vector<1x1x128xf32> to vector<1x128xf32>
    %cst_32 = arith.constant dense<0.000000e+00> : vector<2x128xf32>
    %160 = tpu.matmul %27, %155, %cst_32 {dimension_numbers = #tpu.dot_dimension_numbers<[1], [0], [0], [1], [0, 0, 1, 1], [], []>} : vector<2x32xf32>, vector<32x128xf32>, vector<2x128xf32> -> vector<2x128xf32>
    %161 = vector.broadcast %159 : vector<1x128xf32> to vector<2x128xf32>
    %162 = arith.addf %160, %161 : vector<2x128xf32>
    %cst_33 = arith.constant dense<0.000000e+00> : vector<2x128xf32>
    %163 = tpu.matmul %0, %157, %cst_33 {dimension_numbers = #tpu.dot_dimension_numbers<[1], [0], [0], [1], [0, 0, 1, 1], [], []>} : vector<2x32xf32>, vector<32x128xf32>, vector<2x128xf32> -> vector<2x128xf32>
    %164 = arith.addf %162, %163 : vector<2x128xf32>
    %165 = arith.negf %164 : vector<2x128xf32>
    %166 = math.exp %165 : vector<2x128xf32>
    %cst_34 = arith.constant 1.000000e+00 : f32
    %167 = vector.broadcast %cst_34 : f32 to vector<2x128xf32>
    %168 = arith.addf %167, %166 : vector<2x128xf32>
    %169 = arith.divf %167, %168 : vector<2x128xf32>
    %170 = math.tanh %164 : vector<2x128xf32>
    %171 = vector.extract_strided_slice %169 {offsets = [0, 0], sizes = [2, 32], strides = [1, 1]} : vector<2x128xf32> to vector<2x32xf32>
    %172 = vector.extract_strided_slice %169 {offsets = [0, 32], sizes = [2, 32], strides = [1, 1]} : vector<2x128xf32> to vector<2x32xf32>
    %173 = vector.extract_strided_slice %170 {offsets = [0, 64], sizes = [2, 32], strides = [1, 1]} : vector<2x128xf32> to vector<2x32xf32>
    %174 = vector.extract_strided_slice %169 {offsets = [0, 96], sizes = [2, 32], strides = [1, 1]} : vector<2x128xf32> to vector<2x32xf32>
    %175 = arith.mulf %172, %0 : vector<2x32xf32>
    %176 = arith.mulf %171, %173 : vector<2x32xf32>
    %177 = arith.addf %175, %176 : vector<2x32xf32>
    %178 = math.tanh %177 : vector<2x32xf32>
    %179 = arith.mulf %174, %178 : vector<2x32xf32>
    %cst_35 = arith.constant dense<0.000000e+00> : vector<2x128xf32>
    %180 = tpu.matmul %45, %155, %cst_35 {dimension_numbers = #tpu.dot_dimension_numbers<[1], [0], [0], [1], [0, 0, 1, 1], [], []>} : vector<2x32xf32>, vector<32x128xf32>, vector<2x128xf32> -> vector<2x128xf32>
    %181 = vector.broadcast %159 : vector<1x128xf32> to vector<2x128xf32>
    %182 = arith.addf %180, %181 : vector<2x128xf32>
    %cst_36 = arith.constant dense<0.000000e+00> : vector<2x128xf32>
    %183 = tpu.matmul %179, %157, %cst_36 {dimension_numbers = #tpu.dot_dimension_numbers<[1], [0], [0], [1], [0, 0, 1, 1], [], []>} : vector<2x32xf32>, vector<32x128xf32>, vector<2x128xf32> -> vector<2x128xf32>
    %184 = arith.addf %182, %183 : vector<2x128xf32>
    %185 = arith.negf %184 : vector<2x128xf32>
    %186 = math.exp %185 : vector<2x128xf32>
    %cst_37 = arith.constant 1.000000e+00 : f32
    %187 = vector.broadcast %cst_37 : f32 to vector<2x128xf32>
    %188 = arith.addf %187, %186 : vector<2x128xf32>
    %189 = arith.divf %187, %188 : vector<2x128xf32>
    %190 = math.tanh %184 : vector<2x128xf32>
    %191 = vector.extract_strided_slice %189 {offsets = [0, 0], sizes = [2, 32], strides = [1, 1]} : vector<2x128xf32> to vector<2x32xf32>
    %192 = vector.extract_strided_slice %189 {offsets = [0, 32], sizes = [2, 32], strides = [1, 1]} : vector<2x128xf32> to vector<2x32xf32>
    %193 = vector.extract_strided_slice %190 {offsets = [0, 64], sizes = [2, 32], strides = [1, 1]} : vector<2x128xf32> to vector<2x32xf32>
    %194 = vector.extract_strided_slice %189 {offsets = [0, 96], sizes = [2, 32], strides = [1, 1]} : vector<2x128xf32> to vector<2x32xf32>
    %195 = arith.mulf %192, %177 : vector<2x32xf32>
    %196 = arith.mulf %191, %193 : vector<2x32xf32>
    %197 = arith.addf %195, %196 : vector<2x32xf32>
    %198 = math.tanh %197 : vector<2x32xf32>
    %199 = arith.mulf %194, %198 : vector<2x32xf32>
    %cst_38 = arith.constant dense<0.000000e+00> : vector<2x128xf32>
    %200 = tpu.matmul %63, %155, %cst_38 {dimension_numbers = #tpu.dot_dimension_numbers<[1], [0], [0], [1], [0, 0, 1, 1], [], []>} : vector<2x32xf32>, vector<32x128xf32>, vector<2x128xf32> -> vector<2x128xf32>
    %201 = vector.broadcast %159 : vector<1x128xf32> to vector<2x128xf32>
    %202 = arith.addf %200, %201 : vector<2x128xf32>
    %cst_39 = arith.constant dense<0.000000e+00> : vector<2x128xf32>
    %203 = tpu.matmul %199, %157, %cst_39 {dimension_numbers = #tpu.dot_dimension_numbers<[1], [0], [0], [1], [0, 0, 1, 1], [], []>} : vector<2x32xf32>, vector<32x128xf32>, vector<2x128xf32> -> vector<2x128xf32>
    %204 = arith.addf %202, %203 : vector<2x128xf32>
    %205 = arith.negf %204 : vector<2x128xf32>
    %206 = math.exp %205 : vector<2x128xf32>
    %cst_40 = arith.constant 1.000000e+00 : f32
    %207 = vector.broadcast %cst_40 : f32 to vector<2x128xf32>
    %208 = arith.addf %207, %206 : vector<2x128xf32>
    %209 = arith.divf %207, %208 : vector<2x128xf32>
    %210 = math.tanh %204 : vector<2x128xf32>
    %211 = vector.extract_strided_slice %209 {offsets = [0, 0], sizes = [2, 32], strides = [1, 1]} : vector<2x128xf32> to vector<2x32xf32>
    %212 = vector.extract_strided_slice %209 {offsets = [0, 32], sizes = [2, 32], strides = [1, 1]} : vector<2x128xf32> to vector<2x32xf32>
    %213 = vector.extract_strided_slice %210 {offsets = [0, 64], sizes = [2, 32], strides = [1, 1]} : vector<2x128xf32> to vector<2x32xf32>
    %214 = vector.extract_strided_slice %209 {offsets = [0, 96], sizes = [2, 32], strides = [1, 1]} : vector<2x128xf32> to vector<2x32xf32>
    %215 = arith.mulf %212, %197 : vector<2x32xf32>
    %216 = arith.mulf %211, %213 : vector<2x32xf32>
    %217 = arith.addf %215, %216 : vector<2x32xf32>
    %218 = math.tanh %217 : vector<2x32xf32>
    %219 = arith.mulf %214, %218 : vector<2x32xf32>
    %cst_41 = arith.constant dense<0.000000e+00> : vector<2x128xf32>
    %220 = tpu.matmul %81, %155, %cst_41 {dimension_numbers = #tpu.dot_dimension_numbers<[1], [0], [0], [1], [0, 0, 1, 1], [], []>} : vector<2x32xf32>, vector<32x128xf32>, vector<2x128xf32> -> vector<2x128xf32>
    %221 = vector.broadcast %159 : vector<1x128xf32> to vector<2x128xf32>
    %222 = arith.addf %220, %221 : vector<2x128xf32>
    %cst_42 = arith.constant dense<0.000000e+00> : vector<2x128xf32>
    %223 = tpu.matmul %219, %157, %cst_42 {dimension_numbers = #tpu.dot_dimension_numbers<[1], [0], [0], [1], [0, 0, 1, 1], [], []>} : vector<2x32xf32>, vector<32x128xf32>, vector<2x128xf32> -> vector<2x128xf32>
    %224 = arith.addf %222, %223 : vector<2x128xf32>
    %225 = arith.negf %224 : vector<2x128xf32>
    %226 = math.exp %225 : vector<2x128xf32>
    %cst_43 = arith.constant 1.000000e+00 : f32
    %227 = vector.broadcast %cst_43 : f32 to vector<2x128xf32>
    %228 = arith.addf %227, %226 : vector<2x128xf32>
    %229 = arith.divf %227, %228 : vector<2x128xf32>
    %230 = math.tanh %224 : vector<2x128xf32>
    %231 = vector.extract_strided_slice %229 {offsets = [0, 0], sizes = [2, 32], strides = [1, 1]} : vector<2x128xf32> to vector<2x32xf32>
    %232 = vector.extract_strided_slice %229 {offsets = [0, 32], sizes = [2, 32], strides = [1, 1]} : vector<2x128xf32> to vector<2x32xf32>
    %233 = vector.extract_strided_slice %230 {offsets = [0, 64], sizes = [2, 32], strides = [1, 1]} : vector<2x128xf32> to vector<2x32xf32>
    %234 = vector.extract_strided_slice %229 {offsets = [0, 96], sizes = [2, 32], strides = [1, 1]} : vector<2x128xf32> to vector<2x32xf32>
    %235 = arith.mulf %232, %217 : vector<2x32xf32>
    %236 = arith.mulf %231, %233 : vector<2x32xf32>
    %237 = arith.addf %235, %236 : vector<2x32xf32>
    %238 = math.tanh %237 : vector<2x32xf32>
    %239 = arith.mulf %234, %238 : vector<2x32xf32>
    %cst_44 = arith.constant dense<0.000000e+00> : vector<2x128xf32>
    %240 = tpu.matmul %99, %155, %cst_44 {dimension_numbers = #tpu.dot_dimension_numbers<[1], [0], [0], [1], [0, 0, 1, 1], [], []>} : vector<2x32xf32>, vector<32x128xf32>, vector<2x128xf32> -> vector<2x128xf32>
    %241 = vector.broadcast %159 : vector<1x128xf32> to vector<2x128xf32>
    %242 = arith.addf %240, %241 : vector<2x128xf32>
    %cst_45 = arith.constant dense<0.000000e+00> : vector<2x128xf32>
    %243 = tpu.matmul %239, %157, %cst_45 {dimension_numbers = #tpu.dot_dimension_numbers<[1], [0], [0], [1], [0, 0, 1, 1], [], []>} : vector<2x32xf32>, vector<32x128xf32>, vector<2x128xf32> -> vector<2x128xf32>
    %244 = arith.addf %242, %243 : vector<2x128xf32>
    %245 = arith.negf %244 : vector<2x128xf32>
    %246 = math.exp %245 : vector<2x128xf32>
    %cst_46 = arith.constant 1.000000e+00 : f32
    %247 = vector.broadcast %cst_46 : f32 to vector<2x128xf32>
    %248 = arith.addf %247, %246 : vector<2x128xf32>
    %249 = arith.divf %247, %248 : vector<2x128xf32>
    %250 = math.tanh %244 : vector<2x128xf32>
    %251 = vector.extract_strided_slice %249 {offsets = [0, 0], sizes = [2, 32], strides = [1, 1]} : vector<2x128xf32> to vector<2x32xf32>
    %252 = vector.extract_strided_slice %249 {offsets = [0, 32], sizes = [2, 32], strides = [1, 1]} : vector<2x128xf32> to vector<2x32xf32>
    %253 = vector.extract_strided_slice %250 {offsets = [0, 64], sizes = [2, 32], strides = [1, 1]} : vector<2x128xf32> to vector<2x32xf32>
    %254 = vector.extract_strided_slice %249 {offsets = [0, 96], sizes = [2, 32], strides = [1, 1]} : vector<2x128xf32> to vector<2x32xf32>
    %255 = arith.mulf %252, %237 : vector<2x32xf32>
    %256 = arith.mulf %251, %253 : vector<2x32xf32>
    %257 = arith.addf %255, %256 : vector<2x32xf32>
    %258 = math.tanh %257 : vector<2x32xf32>
    %259 = arith.mulf %254, %258 : vector<2x32xf32>
    %cst_47 = arith.constant dense<0.000000e+00> : vector<2x128xf32>
    %260 = tpu.matmul %117, %155, %cst_47 {dimension_numbers = #tpu.dot_dimension_numbers<[1], [0], [0], [1], [0, 0, 1, 1], [], []>} : vector<2x32xf32>, vector<32x128xf32>, vector<2x128xf32> -> vector<2x128xf32>
    %261 = vector.broadcast %159 : vector<1x128xf32> to vector<2x128xf32>
    %262 = arith.addf %260, %261 : vector<2x128xf32>
    %cst_48 = arith.constant dense<0.000000e+00> : vector<2x128xf32>
    %263 = tpu.matmul %259, %157, %cst_48 {dimension_numbers = #tpu.dot_dimension_numbers<[1], [0], [0], [1], [0, 0, 1, 1], [], []>} : vector<2x32xf32>, vector<32x128xf32>, vector<2x128xf32> -> vector<2x128xf32>
    %264 = arith.addf %262, %263 : vector<2x128xf32>
    %265 = arith.negf %264 : vector<2x128xf32>
    %266 = math.exp %265 : vector<2x128xf32>
    %cst_49 = arith.constant 1.000000e+00 : f32
    %267 = vector.broadcast %cst_49 : f32 to vector<2x128xf32>
    %268 = arith.addf %267, %266 : vector<2x128xf32>
    %269 = arith.divf %267, %268 : vector<2x128xf32>
    %270 = math.tanh %264 : vector<2x128xf32>
    %271 = vector.extract_strided_slice %269 {offsets = [0, 0], sizes = [2, 32], strides = [1, 1]} : vector<2x128xf32> to vector<2x32xf32>
    %272 = vector.extract_strided_slice %269 {offsets = [0, 32], sizes = [2, 32], strides = [1, 1]} : vector<2x128xf32> to vector<2x32xf32>
    %273 = vector.extract_strided_slice %270 {offsets = [0, 64], sizes = [2, 32], strides = [1, 1]} : vector<2x128xf32> to vector<2x32xf32>
    %274 = vector.extract_strided_slice %269 {offsets = [0, 96], sizes = [2, 32], strides = [1, 1]} : vector<2x128xf32> to vector<2x32xf32>
    %275 = arith.mulf %272, %257 : vector<2x32xf32>
    %276 = arith.mulf %271, %273 : vector<2x32xf32>
    %277 = arith.addf %275, %276 : vector<2x32xf32>
    %278 = math.tanh %277 : vector<2x32xf32>
    %279 = arith.mulf %274, %278 : vector<2x32xf32>
    %cst_50 = arith.constant dense<0.000000e+00> : vector<2x128xf32>
    %280 = tpu.matmul %135, %155, %cst_50 {dimension_numbers = #tpu.dot_dimension_numbers<[1], [0], [0], [1], [0, 0, 1, 1], [], []>} : vector<2x32xf32>, vector<32x128xf32>, vector<2x128xf32> -> vector<2x128xf32>
    %281 = vector.broadcast %159 : vector<1x128xf32> to vector<2x128xf32>
    %282 = arith.addf %280, %281 : vector<2x128xf32>
    %cst_51 = arith.constant dense<0.000000e+00> : vector<2x128xf32>
    %283 = tpu.matmul %279, %157, %cst_51 {dimension_numbers = #tpu.dot_dimension_numbers<[1], [0], [0], [1], [0, 0, 1, 1], [], []>} : vector<2x32xf32>, vector<32x128xf32>, vector<2x128xf32> -> vector<2x128xf32>
    %284 = arith.addf %282, %283 : vector<2x128xf32>
    %285 = arith.negf %284 : vector<2x128xf32>
    %286 = math.exp %285 : vector<2x128xf32>
    %cst_52 = arith.constant 1.000000e+00 : f32
    %287 = vector.broadcast %cst_52 : f32 to vector<2x128xf32>
    %288 = arith.addf %287, %286 : vector<2x128xf32>
    %289 = arith.divf %287, %288 : vector<2x128xf32>
    %290 = math.tanh %284 : vector<2x128xf32>
    %291 = vector.extract_strided_slice %289 {offsets = [0, 0], sizes = [2, 32], strides = [1, 1]} : vector<2x128xf32> to vector<2x32xf32>
    %292 = vector.extract_strided_slice %289 {offsets = [0, 32], sizes = [2, 32], strides = [1, 1]} : vector<2x128xf32> to vector<2x32xf32>
    %293 = vector.extract_strided_slice %290 {offsets = [0, 64], sizes = [2, 32], strides = [1, 1]} : vector<2x128xf32> to vector<2x32xf32>
    %294 = vector.extract_strided_slice %289 {offsets = [0, 96], sizes = [2, 32], strides = [1, 1]} : vector<2x128xf32> to vector<2x32xf32>
    %295 = arith.mulf %292, %277 : vector<2x32xf32>
    %296 = arith.mulf %291, %293 : vector<2x32xf32>
    %297 = arith.addf %295, %296 : vector<2x32xf32>
    %298 = math.tanh %297 : vector<2x32xf32>
    %299 = arith.mulf %294, %298 : vector<2x32xf32>
    %cst_53 = arith.constant dense<0.000000e+00> : vector<2x128xf32>
    %300 = tpu.matmul %153, %155, %cst_53 {dimension_numbers = #tpu.dot_dimension_numbers<[1], [0], [0], [1], [0, 0, 1, 1], [], []>} : vector<2x32xf32>, vector<32x128xf32>, vector<2x128xf32> -> vector<2x128xf32>
    %301 = vector.broadcast %159 : vector<1x128xf32> to vector<2x128xf32>
    %302 = arith.addf %300, %301 : vector<2x128xf32>
    %cst_54 = arith.constant dense<0.000000e+00> : vector<2x128xf32>
    %303 = tpu.matmul %299, %157, %cst_54 {dimension_numbers = #tpu.dot_dimension_numbers<[1], [0], [0], [1], [0, 0, 1, 1], [], []>} : vector<2x32xf32>, vector<32x128xf32>, vector<2x128xf32> -> vector<2x128xf32>
    %304 = arith.addf %302, %303 : vector<2x128xf32>
    %305 = arith.negf %304 : vector<2x128xf32>
    %306 = math.exp %305 : vector<2x128xf32>
    %cst_55 = arith.constant 1.000000e+00 : f32
    %307 = vector.broadcast %cst_55 : f32 to vector<2x128xf32>
    %308 = arith.addf %307, %306 : vector<2x128xf32>
    %309 = arith.divf %307, %308 : vector<2x128xf32>
    %310 = math.tanh %304 : vector<2x128xf32>
    %311 = vector.extract_strided_slice %309 {offsets = [0, 0], sizes = [2, 32], strides = [1, 1]} : vector<2x128xf32> to vector<2x32xf32>
    %312 = vector.extract_strided_slice %309 {offsets = [0, 32], sizes = [2, 32], strides = [1, 1]} : vector<2x128xf32> to vector<2x32xf32>
    %313 = vector.extract_strided_slice %310 {offsets = [0, 64], sizes = [2, 32], strides = [1, 1]} : vector<2x128xf32> to vector<2x32xf32>
    %314 = vector.extract_strided_slice %309 {offsets = [0, 96], sizes = [2, 32], strides = [1, 1]} : vector<2x128xf32> to vector<2x32xf32>
    %315 = arith.mulf %312, %297 : vector<2x32xf32>
    %316 = arith.mulf %311, %313 : vector<2x32xf32>
    %317 = arith.addf %315, %316 : vector<2x32xf32>
    %318 = math.tanh %317 : vector<2x32xf32>
    %319 = arith.mulf %314, %318 : vector<2x32xf32>
    %c1 = arith.constant 1 : index
    %c0_56 = arith.constant 0 : index
    %c0_57 = arith.constant 0 : index
    %320 = vector.load %arg4[%c1, %c0_56, %c0_57] : memref<2x32x128xf32, #tpu.memory_space<vmem>>, vector<1x32x128xf32>
    %321 = vector.shape_cast %320 : vector<1x32x128xf32> to vector<32x128xf32>
    %c1_58 = arith.constant 1 : index
    %c0_59 = arith.constant 0 : index
    %c0_60 = arith.constant 0 : index
    %322 = vector.load %arg5[%c1_58, %c0_59, %c0_60] : memref<2x32x128xf32, #tpu.memory_space<vmem>>, vector<1x32x128xf32>
    %323 = vector.shape_cast %322 : vector<1x32x128xf32> to vector<32x128xf32>
    %c1_61 = arith.constant 1 : index
    %c0_62 = arith.constant 0 : index
    %c0_63 = arith.constant 0 : index
    %324 = vector.load %arg6[%c1_61, %c0_62, %c0_63] : memref<2x1x128xf32, #tpu.memory_space<vmem>>, vector<1x1x128xf32>
    %325 = vector.shape_cast %324 : vector<1x1x128xf32> to vector<1x128xf32>
    %cst_64 = arith.constant dense<0.000000e+00> : vector<2x128xf32>
    %326 = tpu.matmul %179, %321, %cst_64 {dimension_numbers = #tpu.dot_dimension_numbers<[1], [0], [0], [1], [0, 0, 1, 1], [], []>} : vector<2x32xf32>, vector<32x128xf32>, vector<2x128xf32> -> vector<2x128xf32>
    %327 = vector.broadcast %325 : vector<1x128xf32> to vector<2x128xf32>
    %328 = arith.addf %326, %327 : vector<2x128xf32>
    %cst_65 = arith.constant dense<0.000000e+00> : vector<2x128xf32>
    %329 = tpu.matmul %0, %323, %cst_65 {dimension_numbers = #tpu.dot_dimension_numbers<[1], [0], [0], [1], [0, 0, 1, 1], [], []>} : vector<2x32xf32>, vector<32x128xf32>, vector<2x128xf32> -> vector<2x128xf32>
    %330 = arith.addf %328, %329 : vector<2x128xf32>
    %331 = arith.negf %330 : vector<2x128xf32>
    %332 = math.exp %331 : vector<2x128xf32>
    %cst_66 = arith.constant 1.000000e+00 : f32
    %333 = vector.broadcast %cst_66 : f32 to vector<2x128xf32>
    %334 = arith.addf %333, %332 : vector<2x128xf32>
    %335 = arith.divf %333, %334 : vector<2x128xf32>
    %336 = math.tanh %330 : vector<2x128xf32>
    %337 = vector.extract_strided_slice %335 {offsets = [0, 0], sizes = [2, 32], strides = [1, 1]} : vector<2x128xf32> to vector<2x32xf32>
    %338 = vector.extract_strided_slice %335 {offsets = [0, 32], sizes = [2, 32], strides = [1, 1]} : vector<2x128xf32> to vector<2x32xf32>
    %339 = vector.extract_strided_slice %336 {offsets = [0, 64], sizes = [2, 32], strides = [1, 1]} : vector<2x128xf32> to vector<2x32xf32>
    %340 = vector.extract_strided_slice %335 {offsets = [0, 96], sizes = [2, 32], strides = [1, 1]} : vector<2x128xf32> to vector<2x32xf32>
    %341 = arith.mulf %338, %0 : vector<2x32xf32>
    %342 = arith.mulf %337, %339 : vector<2x32xf32>
    %343 = arith.addf %341, %342 : vector<2x32xf32>
    %344 = math.tanh %343 : vector<2x32xf32>
    %345 = arith.mulf %340, %344 : vector<2x32xf32>
    %cst_67 = arith.constant dense<0.000000e+00> : vector<2x128xf32>
    %346 = tpu.matmul %199, %321, %cst_67 {dimension_numbers = #tpu.dot_dimension_numbers<[1], [0], [0], [1], [0, 0, 1, 1], [], []>} : vector<2x32xf32>, vector<32x128xf32>, vector<2x128xf32> -> vector<2x128xf32>
    %347 = vector.broadcast %325 : vector<1x128xf32> to vector<2x128xf32>
    %348 = arith.addf %346, %347 : vector<2x128xf32>
    %cst_68 = arith.constant dense<0.000000e+00> : vector<2x128xf32>
    %349 = tpu.matmul %345, %323, %cst_68 {dimension_numbers = #tpu.dot_dimension_numbers<[1], [0], [0], [1], [0, 0, 1, 1], [], []>} : vector<2x32xf32>, vector<32x128xf32>, vector<2x128xf32> -> vector<2x128xf32>
    %350 = arith.addf %348, %349 : vector<2x128xf32>
    %351 = arith.negf %350 : vector<2x128xf32>
    %352 = math.exp %351 : vector<2x128xf32>
    %cst_69 = arith.constant 1.000000e+00 : f32
    %353 = vector.broadcast %cst_69 : f32 to vector<2x128xf32>
    %354 = arith.addf %353, %352 : vector<2x128xf32>
    %355 = arith.divf %353, %354 : vector<2x128xf32>
    %356 = math.tanh %350 : vector<2x128xf32>
    %357 = vector.extract_strided_slice %355 {offsets = [0, 0], sizes = [2, 32], strides = [1, 1]} : vector<2x128xf32> to vector<2x32xf32>
    %358 = vector.extract_strided_slice %355 {offsets = [0, 32], sizes = [2, 32], strides = [1, 1]} : vector<2x128xf32> to vector<2x32xf32>
    %359 = vector.extract_strided_slice %356 {offsets = [0, 64], sizes = [2, 32], strides = [1, 1]} : vector<2x128xf32> to vector<2x32xf32>
    %360 = vector.extract_strided_slice %355 {offsets = [0, 96], sizes = [2, 32], strides = [1, 1]} : vector<2x128xf32> to vector<2x32xf32>
    %361 = arith.mulf %358, %343 : vector<2x32xf32>
    %362 = arith.mulf %357, %359 : vector<2x32xf32>
    %363 = arith.addf %361, %362 : vector<2x32xf32>
    %364 = math.tanh %363 : vector<2x32xf32>
    %365 = arith.mulf %360, %364 : vector<2x32xf32>
    %cst_70 = arith.constant dense<0.000000e+00> : vector<2x128xf32>
    %366 = tpu.matmul %219, %321, %cst_70 {dimension_numbers = #tpu.dot_dimension_numbers<[1], [0], [0], [1], [0, 0, 1, 1], [], []>} : vector<2x32xf32>, vector<32x128xf32>, vector<2x128xf32> -> vector<2x128xf32>
    %367 = vector.broadcast %325 : vector<1x128xf32> to vector<2x128xf32>
    %368 = arith.addf %366, %367 : vector<2x128xf32>
    %cst_71 = arith.constant dense<0.000000e+00> : vector<2x128xf32>
    %369 = tpu.matmul %365, %323, %cst_71 {dimension_numbers = #tpu.dot_dimension_numbers<[1], [0], [0], [1], [0, 0, 1, 1], [], []>} : vector<2x32xf32>, vector<32x128xf32>, vector<2x128xf32> -> vector<2x128xf32>
    %370 = arith.addf %368, %369 : vector<2x128xf32>
    %371 = arith.negf %370 : vector<2x128xf32>
    %372 = math.exp %371 : vector<2x128xf32>
    %cst_72 = arith.constant 1.000000e+00 : f32
    %373 = vector.broadcast %cst_72 : f32 to vector<2x128xf32>
    %374 = arith.addf %373, %372 : vector<2x128xf32>
    %375 = arith.divf %373, %374 : vector<2x128xf32>
    %376 = math.tanh %370 : vector<2x128xf32>
    %377 = vector.extract_strided_slice %375 {offsets = [0, 0], sizes = [2, 32], strides = [1, 1]} : vector<2x128xf32> to vector<2x32xf32>
    %378 = vector.extract_strided_slice %375 {offsets = [0, 32], sizes = [2, 32], strides = [1, 1]} : vector<2x128xf32> to vector<2x32xf32>
    %379 = vector.extract_strided_slice %376 {offsets = [0, 64], sizes = [2, 32], strides = [1, 1]} : vector<2x128xf32> to vector<2x32xf32>
    %380 = vector.extract_strided_slice %375 {offsets = [0, 96], sizes = [2, 32], strides = [1, 1]} : vector<2x128xf32> to vector<2x32xf32>
    %381 = arith.mulf %378, %363 : vector<2x32xf32>
    %382 = arith.mulf %377, %379 : vector<2x32xf32>
    %383 = arith.addf %381, %382 : vector<2x32xf32>
    %384 = math.tanh %383 : vector<2x32xf32>
    %385 = arith.mulf %380, %384 : vector<2x32xf32>
    %cst_73 = arith.constant dense<0.000000e+00> : vector<2x128xf32>
    %386 = tpu.matmul %239, %321, %cst_73 {dimension_numbers = #tpu.dot_dimension_numbers<[1], [0], [0], [1], [0, 0, 1, 1], [], []>} : vector<2x32xf32>, vector<32x128xf32>, vector<2x128xf32> -> vector<2x128xf32>
    %387 = vector.broadcast %325 : vector<1x128xf32> to vector<2x128xf32>
    %388 = arith.addf %386, %387 : vector<2x128xf32>
    %cst_74 = arith.constant dense<0.000000e+00> : vector<2x128xf32>
    %389 = tpu.matmul %385, %323, %cst_74 {dimension_numbers = #tpu.dot_dimension_numbers<[1], [0], [0], [1], [0, 0, 1, 1], [], []>} : vector<2x32xf32>, vector<32x128xf32>, vector<2x128xf32> -> vector<2x128xf32>
    %390 = arith.addf %388, %389 : vector<2x128xf32>
    %391 = arith.negf %390 : vector<2x128xf32>
    %392 = math.exp %391 : vector<2x128xf32>
    %cst_75 = arith.constant 1.000000e+00 : f32
    %393 = vector.broadcast %cst_75 : f32 to vector<2x128xf32>
    %394 = arith.addf %393, %392 : vector<2x128xf32>
    %395 = arith.divf %393, %394 : vector<2x128xf32>
    %396 = math.tanh %390 : vector<2x128xf32>
    %397 = vector.extract_strided_slice %395 {offsets = [0, 0], sizes = [2, 32], strides = [1, 1]} : vector<2x128xf32> to vector<2x32xf32>
    %398 = vector.extract_strided_slice %395 {offsets = [0, 32], sizes = [2, 32], strides = [1, 1]} : vector<2x128xf32> to vector<2x32xf32>
    %399 = vector.extract_strided_slice %396 {offsets = [0, 64], sizes = [2, 32], strides = [1, 1]} : vector<2x128xf32> to vector<2x32xf32>
    %400 = vector.extract_strided_slice %395 {offsets = [0, 96], sizes = [2, 32], strides = [1, 1]} : vector<2x128xf32> to vector<2x32xf32>
    %401 = arith.mulf %398, %383 : vector<2x32xf32>
    %402 = arith.mulf %397, %399 : vector<2x32xf32>
    %403 = arith.addf %401, %402 : vector<2x32xf32>
    %404 = math.tanh %403 : vector<2x32xf32>
    %405 = arith.mulf %400, %404 : vector<2x32xf32>
    %cst_76 = arith.constant dense<0.000000e+00> : vector<2x128xf32>
    %406 = tpu.matmul %259, %321, %cst_76 {dimension_numbers = #tpu.dot_dimension_numbers<[1], [0], [0], [1], [0, 0, 1, 1], [], []>} : vector<2x32xf32>, vector<32x128xf32>, vector<2x128xf32> -> vector<2x128xf32>
    %407 = vector.broadcast %325 : vector<1x128xf32> to vector<2x128xf32>
    %408 = arith.addf %406, %407 : vector<2x128xf32>
    %cst_77 = arith.constant dense<0.000000e+00> : vector<2x128xf32>
    %409 = tpu.matmul %405, %323, %cst_77 {dimension_numbers = #tpu.dot_dimension_numbers<[1], [0], [0], [1], [0, 0, 1, 1], [], []>} : vector<2x32xf32>, vector<32x128xf32>, vector<2x128xf32> -> vector<2x128xf32>
    %410 = arith.addf %408, %409 : vector<2x128xf32>
    %411 = arith.negf %410 : vector<2x128xf32>
    %412 = math.exp %411 : vector<2x128xf32>
    %cst_78 = arith.constant 1.000000e+00 : f32
    %413 = vector.broadcast %cst_78 : f32 to vector<2x128xf32>
    %414 = arith.addf %413, %412 : vector<2x128xf32>
    %415 = arith.divf %413, %414 : vector<2x128xf32>
    %416 = math.tanh %410 : vector<2x128xf32>
    %417 = vector.extract_strided_slice %415 {offsets = [0, 0], sizes = [2, 32], strides = [1, 1]} : vector<2x128xf32> to vector<2x32xf32>
    %418 = vector.extract_strided_slice %415 {offsets = [0, 32], sizes = [2, 32], strides = [1, 1]} : vector<2x128xf32> to vector<2x32xf32>
    %419 = vector.extract_strided_slice %416 {offsets = [0, 64], sizes = [2, 32], strides = [1, 1]} : vector<2x128xf32> to vector<2x32xf32>
    %420 = vector.extract_strided_slice %415 {offsets = [0, 96], sizes = [2, 32], strides = [1, 1]} : vector<2x128xf32> to vector<2x32xf32>
    %421 = arith.mulf %418, %403 : vector<2x32xf32>
    %422 = arith.mulf %417, %419 : vector<2x32xf32>
    %423 = arith.addf %421, %422 : vector<2x32xf32>
    %424 = math.tanh %423 : vector<2x32xf32>
    %425 = arith.mulf %420, %424 : vector<2x32xf32>
    %cst_79 = arith.constant dense<0.000000e+00> : vector<2x128xf32>
    %426 = tpu.matmul %279, %321, %cst_79 {dimension_numbers = #tpu.dot_dimension_numbers<[1], [0], [0], [1], [0, 0, 1, 1], [], []>} : vector<2x32xf32>, vector<32x128xf32>, vector<2x128xf32> -> vector<2x128xf32>
    %427 = vector.broadcast %325 : vector<1x128xf32> to vector<2x128xf32>
    %428 = arith.addf %426, %427 : vector<2x128xf32>
    %cst_80 = arith.constant dense<0.000000e+00> : vector<2x128xf32>
    %429 = tpu.matmul %425, %323, %cst_80 {dimension_numbers = #tpu.dot_dimension_numbers<[1], [0], [0], [1], [0, 0, 1, 1], [], []>} : vector<2x32xf32>, vector<32x128xf32>, vector<2x128xf32> -> vector<2x128xf32>
    %430 = arith.addf %428, %429 : vector<2x128xf32>
    %431 = arith.negf %430 : vector<2x128xf32>
    %432 = math.exp %431 : vector<2x128xf32>
    %cst_81 = arith.constant 1.000000e+00 : f32
    %433 = vector.broadcast %cst_81 : f32 to vector<2x128xf32>
    %434 = arith.addf %433, %432 : vector<2x128xf32>
    %435 = arith.divf %433, %434 : vector<2x128xf32>
    %436 = math.tanh %430 : vector<2x128xf32>
    %437 = vector.extract_strided_slice %435 {offsets = [0, 0], sizes = [2, 32], strides = [1, 1]} : vector<2x128xf32> to vector<2x32xf32>
    %438 = vector.extract_strided_slice %435 {offsets = [0, 32], sizes = [2, 32], strides = [1, 1]} : vector<2x128xf32> to vector<2x32xf32>
    %439 = vector.extract_strided_slice %436 {offsets = [0, 64], sizes = [2, 32], strides = [1, 1]} : vector<2x128xf32> to vector<2x32xf32>
    %440 = vector.extract_strided_slice %435 {offsets = [0, 96], sizes = [2, 32], strides = [1, 1]} : vector<2x128xf32> to vector<2x32xf32>
    %441 = arith.mulf %438, %423 : vector<2x32xf32>
    %442 = arith.mulf %437, %439 : vector<2x32xf32>
    %443 = arith.addf %441, %442 : vector<2x32xf32>
    %444 = math.tanh %443 : vector<2x32xf32>
    %445 = arith.mulf %440, %444 : vector<2x32xf32>
    %cst_82 = arith.constant dense<0.000000e+00> : vector<2x128xf32>
    %446 = tpu.matmul %299, %321, %cst_82 {dimension_numbers = #tpu.dot_dimension_numbers<[1], [0], [0], [1], [0, 0, 1, 1], [], []>} : vector<2x32xf32>, vector<32x128xf32>, vector<2x128xf32> -> vector<2x128xf32>
    %447 = vector.broadcast %325 : vector<1x128xf32> to vector<2x128xf32>
    %448 = arith.addf %446, %447 : vector<2x128xf32>
    %cst_83 = arith.constant dense<0.000000e+00> : vector<2x128xf32>
    %449 = tpu.matmul %445, %323, %cst_83 {dimension_numbers = #tpu.dot_dimension_numbers<[1], [0], [0], [1], [0, 0, 1, 1], [], []>} : vector<2x32xf32>, vector<32x128xf32>, vector<2x128xf32> -> vector<2x128xf32>
    %450 = arith.addf %448, %449 : vector<2x128xf32>
    %451 = arith.negf %450 : vector<2x128xf32>
    %452 = math.exp %451 : vector<2x128xf32>
    %cst_84 = arith.constant 1.000000e+00 : f32
    %453 = vector.broadcast %cst_84 : f32 to vector<2x128xf32>
    %454 = arith.addf %453, %452 : vector<2x128xf32>
    %455 = arith.divf %453, %454 : vector<2x128xf32>
    %456 = math.tanh %450 : vector<2x128xf32>
    %457 = vector.extract_strided_slice %455 {offsets = [0, 0], sizes = [2, 32], strides = [1, 1]} : vector<2x128xf32> to vector<2x32xf32>
    %458 = vector.extract_strided_slice %455 {offsets = [0, 32], sizes = [2, 32], strides = [1, 1]} : vector<2x128xf32> to vector<2x32xf32>
    %459 = vector.extract_strided_slice %456 {offsets = [0, 64], sizes = [2, 32], strides = [1, 1]} : vector<2x128xf32> to vector<2x32xf32>
    %460 = vector.extract_strided_slice %455 {offsets = [0, 96], sizes = [2, 32], strides = [1, 1]} : vector<2x128xf32> to vector<2x32xf32>
    %461 = arith.mulf %458, %443 : vector<2x32xf32>
    %462 = arith.mulf %457, %459 : vector<2x32xf32>
    %463 = arith.addf %461, %462 : vector<2x32xf32>
    %464 = math.tanh %463 : vector<2x32xf32>
    %465 = arith.mulf %460, %464 : vector<2x32xf32>
    %cst_85 = arith.constant dense<0.000000e+00> : vector<2x128xf32>
    %466 = tpu.matmul %319, %321, %cst_85 {dimension_numbers = #tpu.dot_dimension_numbers<[1], [0], [0], [1], [0, 0, 1, 1], [], []>} : vector<2x32xf32>, vector<32x128xf32>, vector<2x128xf32> -> vector<2x128xf32>
    %467 = vector.broadcast %325 : vector<1x128xf32> to vector<2x128xf32>
    %468 = arith.addf %466, %467 : vector<2x128xf32>
    %cst_86 = arith.constant dense<0.000000e+00> : vector<2x128xf32>
    %469 = tpu.matmul %465, %323, %cst_86 {dimension_numbers = #tpu.dot_dimension_numbers<[1], [0], [0], [1], [0, 0, 1, 1], [], []>} : vector<2x32xf32>, vector<32x128xf32>, vector<2x128xf32> -> vector<2x128xf32>
    %470 = arith.addf %468, %469 : vector<2x128xf32>
    %471 = arith.negf %470 : vector<2x128xf32>
    %472 = math.exp %471 : vector<2x128xf32>
    %cst_87 = arith.constant 1.000000e+00 : f32
    %473 = vector.broadcast %cst_87 : f32 to vector<2x128xf32>
    %474 = arith.addf %473, %472 : vector<2x128xf32>
    %475 = arith.divf %473, %474 : vector<2x128xf32>
    %476 = math.tanh %470 : vector<2x128xf32>
    %477 = vector.extract_strided_slice %475 {offsets = [0, 0], sizes = [2, 32], strides = [1, 1]} : vector<2x128xf32> to vector<2x32xf32>
    %478 = vector.extract_strided_slice %475 {offsets = [0, 32], sizes = [2, 32], strides = [1, 1]} : vector<2x128xf32> to vector<2x32xf32>
    %479 = vector.extract_strided_slice %476 {offsets = [0, 64], sizes = [2, 32], strides = [1, 1]} : vector<2x128xf32> to vector<2x32xf32>
    %480 = vector.extract_strided_slice %475 {offsets = [0, 96], sizes = [2, 32], strides = [1, 1]} : vector<2x128xf32> to vector<2x32xf32>
    %481 = arith.mulf %478, %463 : vector<2x32xf32>
    %482 = arith.mulf %477, %479 : vector<2x32xf32>
    %483 = arith.addf %481, %482 : vector<2x32xf32>
    %484 = math.tanh %483 : vector<2x32xf32>
    %485 = arith.mulf %480, %484 : vector<2x32xf32>
    %c0_88 = arith.constant 0 : index
    %c0_89 = arith.constant 0 : index
    %486 = vector.load %arg7[%c0_88, %c0_89] : memref<32x1xf32, #tpu.memory_space<vmem>>, vector<32x1xf32>
    %cst_90 = arith.constant dense<0.000000e+00> : vector<2x1xf32>
    %487 = tpu.matmul %485, %486, %cst_90 {dimension_numbers = #tpu.dot_dimension_numbers<[1], [0], [0], [1], [0, 0, 1, 1], [], []>} : vector<2x32xf32>, vector<32x1xf32>, vector<2x1xf32> -> vector<2x1xf32>
    %c0_91 = arith.constant 0 : index
    %c0_92 = arith.constant 0 : index
    %488 = vector.load %arg8[%c0_91, %c0_92] : memref<1x1xf32, #tpu.memory_space<vmem>>, vector<1x1xf32>
    %489 = vector.broadcast %488 : vector<1x1xf32> to vector<2x1xf32>
    %490 = arith.addf %487, %489 : vector<2x1xf32>
    %c0_93 = arith.constant 0 : index
    %c0_94 = arith.constant 0 : index
    %491 = vector.load %arg9[%c0_93, %c0_94] : memref<2x1xf32, #tpu.memory_space<vmem>>, vector<2x1xf32>
    tpu.vector_store %arg9[%c0_93, %c0_94], %490 {strides = array<i32>} : memref<2x1xf32, #tpu.memory_space<vmem>>, vector<2x1xf32>,
    return
  }
}

</mosaic_0001>

<llo_original>
// kernel: tpu_custom_call.1
$region0: #{tpu_custom_call.1}
  #allocation0 [shape = 'u32[]', space=smem, size = 0x4, offset = 0x4, fixed_abs, tag = 'smem constant byte address 0x4 - core index']
  #allocation1 [shape = 'u32[72,128]{1,0:T(1,128)}', space=vmem, size = 0x9000, scoped, tag = 'internal scratch']
  #allocation2 [shape = 'f32[1,1]{1,0:T(1,128)S(1)}', space=vmem, size = 0x200, scoped, tag = 'scoped memory for tpu_custom_call.1']
  %s0 = inlined_call_operand.vmem [shape: f32[16,1], index: 0, kind: input, shape index: {}]
  %s1 = inlined_call_operand.vmem [shape: f32[1,128], index: 1, kind: input, shape index: {}]
  %s2 = inlined_call_operand.vmem [shape: f32[32,128], index: 2, kind: input, shape index: {}]
  %s3 = inlined_call_operand.vmem [shape: f32[1,128], index: 3, kind: input, shape index: {}]
  %s4 = inlined_call_operand.hbm [shape: f32[2,32,128], index: 4, kind: input, shape index: {}]
  %s5 = inlined_call_operand.hbm [shape: f32[2,32,128], index: 5, kind: input, shape index: {}]
  %s6 = inlined_call_operand.vmem [shape: f32[2,1,128], index: 6, kind: input, shape index: {}]
  %s7 = inlined_call_operand.vmem [shape: f32[32,1], index: 7, kind: input, shape index: {}]
  %s8 = inlined_call_operand.<no memory space> [shape: f32[1,1], index: 8, kind: input, shape index: {}]
  %s9 = inlined_call_operand.vmem [shape: f32[2,1], index: 9, kind: output, shape index: {}]
  %s10 = sld [smem:[#allocation0]]
  $region54: #{tpu_custom_call.1} parent=0
    _
  %s12 = ssub.s32 1, %s10
  %s13 = scalar_select 0, %s12, %s10
  %v14 = vstv %s8
  %15 = vst [vmem:[#allocation2] sm:$0x1] %v14
  $region1: #{tpu_custom_call.1} parent=0
    #allocation3 [shape = 'u8[32768]{0}', space=vmem, size = 0x8000, scoped, tag = 'input window, operand 4, single buffered']
    #allocation4 [shape = 's32[1]{0}', space=sflag, size = 0x4, scoped, tag = 'scoped memory for tpu_custom_call.1']
    #allocation5 [shape = 'u8[32768]{0}', space=vmem, size = 0x8000, scoped, tag = 'input window, operand 5, single buffered']
    #allocation6 [shape = 's32[1]{0}', space=sflag, size = 0x4, scoped, tag = 'scoped memory for tpu_custom_call.1']
    %16 = vsyncpa [#allocation4], 0
    %17 = vsyncpa [#allocation6], 0
    // Predicated region
    $region2: #{tpu_custom_call.1} parent=1 // pred_check
      _
    $region3: #{tpu_custom_call.1} parent=1 // pred_check_branch
      %19 = sbr.rel (0) target = $region5
    $region4: #{tpu_custom_call.1} parent=1 // pred_region
      _
    $region5: #{tpu_custom_call.1} parent=1 // pred_fallthru
      _
    // Predicated region
    $region6: #{tpu_custom_call.1} parent=1 // pred_check
      _
    $region7: #{tpu_custom_call.1} parent=1 // pred_check_branch
      %21 = sbr.rel (0) target = $region9
    $region8: #{tpu_custom_call.1} parent=1 // pred_region
      _
    $region9: #{tpu_custom_call.1} parent=1 // pred_fallthru
      _
    // Predicated region
    $region10: #{tpu_custom_call.1} parent=1 // pred_check
      _
    $region11: #{tpu_custom_call.1} parent=1 // pred_check_branch
      %23 = sbr.rel (0) target = $region13
    $region12: #{tpu_custom_call.1} parent=1 // pred_region
      _
    $region13: #{tpu_custom_call.1} parent=1 // pred_fallthru
      _
    // Predicated region
    $region14: #{tpu_custom_call.1} parent=1 // pred_check
      _
    $region15: #{tpu_custom_call.1} parent=1 // pred_check_branch
      %25 = sbr.rel (0) target = $region17
    $region16: #{tpu_custom_call.1} parent=1 // pred_region
      _
    $region17: #{tpu_custom_call.1} parent=1 // pred_fallthru
      _
    // Predicated region
    $region18: #{tpu_custom_call.1} parent=1 // pred_check
      _
    $region19: #{tpu_custom_call.1} parent=1 // pred_check_branch
      %27 = sbr.rel (0) target = $region21
    $region20: #{tpu_custom_call.1} parent=1 // pred_region
      %29 = vsyncadd [#allocation4], 0
      %s30 = sshll.u32 %s4, 4
      %s31 = int_to_ptr.hbm [resolvable:$true] %s30
      %s32 = sshll.u32 [#allocation3], 4
      %s33 = int_to_ptr.vmem [resolvable:$true] %s32
      %38 = dma.hbm_to_vmem [thread:$0]  %s31, 1024, %s33, [#allocation4], 128, 128, 8
    $region21: #{tpu_custom_call.1} parent=1 // pred_fallthru
      _
    // Predicated region
    $region22: #{tpu_custom_call.1} parent=1 // pred_check
      _
    $region23: #{tpu_custom_call.1} parent=1 // pred_check_branch
      %40 = sbr.rel (0) target = $region25
    $region24: #{tpu_custom_call.1} parent=1 // pred_region
      %42 = vsyncadd [#allocation6], 0
      %s43 = sshll.u32 %s5, 4
      %s44 = int_to_ptr.hbm [resolvable:$true] %s43
      %s45 = sshll.u32 [#allocation5], 4
      %s46 = int_to_ptr.vmem [resolvable:$true] %s45
      %51 = dma.hbm_to_vmem [thread:$0]  %s44, 1024, %s46, [#allocation6], 128, 128, 8
    $region25: #{tpu_custom_call.1} parent=1 // pred_fallthru
      _
    // Predicated region
    $region26: #{tpu_custom_call.1} parent=1 // pred_check
      _
    $region27: #{tpu_custom_call.1} parent=1 // pred_check_branch
      %53 = sbr.rel (0) target = $region29
    $region28: #{tpu_custom_call.1} parent=1 // pred_region
      _
    $region29: #{tpu_custom_call.1} parent=1 // pred_fallthru
      _
    // Predicated region
    $region30: #{tpu_custom_call.1} parent=1 // pred_check
      _
    $region31: #{tpu_custom_call.1} parent=1 // pred_check_branch
      %55 = sbr.rel (0) target = $region33
    $region32: #{tpu_custom_call.1} parent=1 // pred_region
      _
    $region33: #{tpu_custom_call.1} parent=1 // pred_fallthru
      _
    // Predicated region
    $region34: #{tpu_custom_call.1} parent=1 // pred_check
      _
    $region35: #{tpu_custom_call.1} parent=1 // pred_check_branch
      %57 = sbr.rel (0) target = $region37
    $region36: #{tpu_custom_call.1} parent=1 // pred_region
      _
    $region37: #{tpu_custom_call.1} parent=1 // pred_fallthru
      _
    // Predicated region
    $region38: #{tpu_custom_call.1} parent=1 // pred_check
      _
    $region39: #{tpu_custom_call.1} parent=1 // pred_check_branch
      %59 = sbr.rel (0) target = $region41
    $region40: #{tpu_custom_call.1} parent=1 // pred_region
      %61 = dma.done [#allocation4], 1024
    $region41: #{tpu_custom_call.1} parent=1 // pred_fallthru
      _
    // Predicated region
    $region42: #{tpu_custom_call.1} parent=1 // pred_check
      _
    $region43: #{tpu_custom_call.1} parent=1 // pred_check_branch
      %63 = sbr.rel (0) target = $region45
    $region44: #{tpu_custom_call.1} parent=1 // pred_region
      %65 = dma.done [#allocation6], 1024
    $region45: #{tpu_custom_call.1} parent=1 // pred_fallthru
      _
    %v66 = vld [vmem:[%s0] sm:$0xff]
    %v67 = vld [vmem:[%s0 + $0x8] sm:$0xff]
    %v68 = vld [vmem:[%s1] sm:$0x1]
    %70 = vset.pattern.permute.xlu0 0
    %71 = vperm.xlu0 %70, %v66
    %v72 = vpop.permute.xlu0 %71
    %75 = vset.pattern.permute.xlu0 0
    %76 = vperm.xlu0 %75, %v67
    %v77 = vpop.permute.xlu0 %76
    %v80 = vperm.slane %v68, 0
    %v82 = vmul.f32 %v72, %v80
    %v83 = vmul.f32 %v77, %v80
    %v84 = vld [vmem:[%s3] sm:$0x1]
    %v86 = vperm.slane %v84, 0
    %v88 = vadd.f32 %v82, %v86
    %v89 = vadd.f32 %v83, %v86
    %v90 = vld [vmem:[%s2] sm:$0xff]
    %v91 = vld [vmem:[%s2 + $0x8] sm:$0xff]
    %v92 = vld [vmem:[%s2 + $0x10] sm:$0xff]
    %v93 = vld [vmem:[%s2 + $0x18] sm:$0xff]
    %vm94 = vcmask 261120
    %v96 = vsel %vm94, 0.0, 0
    %98 = vmatpush.msra.mxu0 0.0
    %99 = vmatpush.msra.mxu0 0.0
    %100 = vmatpush.msra.mxu0 0.0
    %101 = vmatpush.msra.mxu0 0.0
    %102 = vmatpush.msra.mxu0 0.0
    %103 = vmatpush.msra.mxu0 0.0
    %104 = vmatpush.msra.mxu0 0.0
    %105 = vmatpush.msra.mxu0 0.0
    %106 = vmatpush.msra.mxu0 0.0
    %107 = vmatpush.msra.mxu0 0.0
    %108 = vmatpush.msra.mxu0 0.0
    %109 = vmatpush.msra.mxu0 0.0
    %110 = vmatpush.msra.mxu0 %v93
    %111 = vmatpush.msra.mxu0 %v92
    %112 = vmatpush.msra.mxu0 %v91
    %113 = vmatpush.msra.mxu0 %v90
    %114 = vmatmul.f32.gmra.mxu0 %v96
    %v115 = vpop.f32.mrf.mxu0
    %v116 = vadd.f32 0.0, %v115
    %117 = vdwg.mxu0
    %v118 = vadd.f32 %v88, %v116
    %v119 = vxor.u32 %v118, 2147483648
    %v120 = vmul.f32 %v119, 1.442695
    %v121 = vpow.pop %v120
    %v122 = vadd.f32 %v121, 1.0
    %v123 = vrcp.pop %v122
    %v124 = vmul.f32 %v122, %v123
    %v125 = vsub.f32 1.0, %v124
    %v126 = vmul.f32 %v123, %v125
    %v127 = vadd.f32 %v123, %v126
    %vm128 = vweird.f32 %v122
    %vm129 = vweird.f32 %v123
    %vm130 = vmor %vm128, %vm129
    %v131 = vsel %vm130, %v123, %v127
    %v132 = vand.u32 2147483647, %v122
    %vm133 = vcmp.eq.f32.partialorder %v132, 8.507059e+37
    %v134 = vand.u32 %v122, 2147483648
    %v135 = vor.u32 1.1754944e-38, %v134
    %v136 = vsel %vm133, %v135, %v131
    %v137 = vmul.f32 1.0, %v136
    %v138 = vtanh.pop %v118
    %v139 = vmul.f32 %v137, 0.0
    %141 = vrot.lane.b32.xlu0 %v138, 64
    %v142 = vpop.permute.xlu0 %141
    %v144 = vmul.f32 %v137, %v142
    %146 = vrot.lane.b32.xlu0 %v144, 32
    %v147 = vpop.permute.xlu0 %146
    %v149 = vadd.f32 %v139, %v147
    %v150 = vtanh.pop %v149
    %152 = vrot.lane.b32.xlu0 %v150, 64
    %v153 = vpop.permute.xlu0 %152
    %v155 = vmul.f32 %v137, %v153
    %157 = vrot.lane.b32.xlu0 %v155, 32
    %v158 = vpop.permute.xlu0 %157
    %v159 = vsel %vm94, %v158, 0
    %161 = vmatpush.msra.mxu0 0.0
    %162 = vmatpush.msra.mxu0 0.0
    %163 = vmatpush.msra.mxu0 0.0
    %164 = vmatpush.msra.mxu0 0.0
    %165 = vmatpush.msra.mxu0 0.0
    %166 = vmatpush.msra.mxu0 0.0
    %167 = vmatpush.msra.mxu0 0.0
    %168 = vmatpush.msra.mxu0 0.0
    %169 = vmatpush.msra.mxu0 0.0
    %170 = vmatpush.msra.mxu0 0.0
    %171 = vmatpush.msra.mxu0 0.0
    %172 = vmatpush.msra.mxu0 0.0
    %173 = vmatpush.msra.mxu0 %v93
    %174 = vmatpush.msra.mxu0 %v92
    %175 = vmatpush.msra.mxu0 %v91
    %176 = vmatpush.msra.mxu0 %v90
    %177 = vmatmul.f32.gmra.mxu0 %v159
    %v178 = vpop.f32.mrf.mxu0
    %v179 = vadd.f32 0.0, %v178
    %180 = vdwg.mxu0
    %v182 = vrot.slane %v179, 6
    %v184 = vadd.f32 %v88, %v182
    %v185 = vxor.u32 %v184, 2147483648
    %v186 = vmul.f32 %v185, 1.442695
    %v187 = vpow.pop %v186
    %v188 = vadd.f32 %v187, 1.0
    %v189 = vrcp.pop %v188
    %v190 = vmul.f32 %v188, %v189
    %v191 = vsub.f32 1.0, %v190
    %v192 = vmul.f32 %v189, %v191
    %v193 = vadd.f32 %v189, %v192
    %vm194 = vweird.f32 %v188
    %vm195 = vweird.f32 %v189
    %vm196 = vmor %vm194, %vm195
    %v197 = vsel %vm196, %v189, %v193
    %v198 = vand.u32 2147483647, %v188
    %vm199 = vcmp.eq.f32.partialorder %v198, 8.507059e+37
    %v200 = vand.u32 %v188, 2147483648
    %v201 = vor.u32 1.1754944e-38, %v200
    %v202 = vsel %vm199, %v201, %v197
    %v203 = vmul.f32 1.0, %v202
    %v204 = vtanh.pop %v184
    %v206 = vrot.slane %v149, 6
    %v208 = vmul.f32 %v203, %v206
    %210 = vrot.lane.b32.xlu0 %v204, 64
    %v211 = vpop.permute.xlu0 %210
    %v213 = vmul.f32 %v203, %v211
    %215 = vrot.lane.b32.xlu0 %v213, 32
    %v216 = vpop.permute.xlu0 %215
    %v218 = vadd.f32 %v208, %v216
    %v219 = vtanh.pop %v218
    %221 = vrot.lane.b32.xlu0 %v219, 64
    %v222 = vpop.permute.xlu0 %221
    %v224 = vmul.f32 %v203, %v222
    %v226 = vrot.slane %v224, 2
    %227 = vrot.lane.b32.xlu0 %v226, 32
    %v228 = vpop.permute.xlu0 %227
    %v229 = vsel %vm94, %v228, 0
    %231 = vmatpush.msra.mxu0 0.0
    %232 = vmatpush.msra.mxu0 0.0
    %233 = vmatpush.msra.mxu0 0.0
    %234 = vmatpush.msra.mxu0 0.0
    %235 = vmatpush.msra.mxu0 0.0
    %236 = vmatpush.msra.mxu0 0.0
    %237 = vmatpush.msra.mxu0 0.0
    %238 = vmatpush.msra.mxu0 0.0
    %239 = vmatpush.msra.mxu0 0.0
    %240 = vmatpush.msra.mxu0 0.0
    %241 = vmatpush.msra.mxu0 0.0
    %242 = vmatpush.msra.mxu0 0.0
    %243 = vmatpush.msra.mxu0 %v93
    %244 = vmatpush.msra.mxu0 %v92
    %245 = vmatpush.msra.mxu0 %v91
    %246 = vmatpush.msra.mxu0 %v90
    %247 = vmatmul.f32.gmra.mxu0 %v229
    %v248 = vpop.f32.mrf.mxu0
    %v249 = vadd.f32 0.0, %v248
    %250 = vdwg.mxu0
    %v252 = vrot.slane %v249, 4
    %v254 = vadd.f32 %v88, %v252
    %v255 = vxor.u32 %v254, 2147483648
    %v256 = vmul.f32 %v255, 1.442695
    %v257 = vpow.pop %v256
    %v258 = vadd.f32 %v257, 1.0
    %v259 = vrcp.pop %v258
    %v260 = vmul.f32 %v258, %v259
    %v261 = vsub.f32 1.0, %v260
    %v262 = vmul.f32 %v259, %v261
    %v263 = vadd.f32 %v259, %v262
    %vm264 = vweird.f32 %v258
    %vm265 = vweird.f32 %v259
    %vm266 = vmor %vm264, %vm265
    %v267 = vsel %vm266, %v259, %v263
    %v268 = vand.u32 2147483647, %v258
    %vm269 = vcmp.eq.f32.partialorder %v268, 8.507059e+37
    %v270 = vand.u32 %v258, 2147483648
    %v271 = vor.u32 1.1754944e-38, %v270
    %v272 = vsel %vm269, %v271, %v267
    %v273 = vmul.f32 1.0, %v272
    %v274 = vtanh.pop %v254
    %v276 = vrot.slane %v218, 6
    %v278 = vmul.f32 %v273, %v276
    %280 = vrot.lane.b32.xlu0 %v274, 64
    %v281 = vpop.permute.xlu0 %280
    %v283 = vmul.f32 %v273, %v281
    %285 = vrot.lane.b32.xlu0 %v283, 32
    %v286 = vpop.permute.xlu0 %285
    %v288 = vadd.f32 %v278, %v286
    %v289 = vtanh.pop %v288
    %291 = vrot.lane.b32.xlu0 %v289, 64
    %v292 = vpop.permute.xlu0 %291
    %v294 = vmul.f32 %v273, %v292
    %v296 = vrot.slane %v294, 4
    %297 = vrot.lane.b32.xlu0 %v296, 32
    %v298 = vpop.permute.xlu0 %297
    %v299 = vsel %vm94, %v298, 0
    %301 = vmatpush.msra.mxu0 0.0
    %302 = vmatpush.msra.mxu0 0.0
    %303 = vmatpush.msra.mxu0 0.0
    %304 = vmatpush.msra.mxu0 0.0
    %305 = vmatpush.msra.mxu0 0.0
    %306 = vmatpush.msra.mxu0 0.0
    %307 = vmatpush.msra.mxu0 0.0
    %308 = vmatpush.msra.mxu0 0.0
    %309 = vmatpush.msra.mxu0 0.0
    %310 = vmatpush.msra.mxu0 0.0
    %311 = vmatpush.msra.mxu0 0.0
    %312 = vmatpush.msra.mxu0 0.0
    %313 = vmatpush.msra.mxu0 %v93
    %314 = vmatpush.msra.mxu0 %v92
    %315 = vmatpush.msra.mxu0 %v91
    %316 = vmatpush.msra.mxu0 %v90
    %317 = vmatmul.f32.gmra.mxu0 %v299
    %v318 = vpop.f32.mrf.mxu0
    %v319 = vadd.f32 0.0, %v318
    %320 = vdwg.mxu0
    %v322 = vrot.slane %v319, 2
    %v324 = vadd.f32 %v88, %v322
    %v325 = vxor.u32 %v324, 2147483648
    %v326 = vmul.f32 %v325, 1.442695
    %v327 = vpow.pop %v326
    %v328 = vadd.f32 %v327, 1.0
    %v329 = vrcp.pop %v328
    %v330 = vmul.f32 %v328, %v329
    %v331 = vsub.f32 1.0, %v330
    %v332 = vmul.f32 %v329, %v331
    %v333 = vadd.f32 %v329, %v332
    %vm334 = vweird.f32 %v328
    %vm335 = vweird.f32 %v329
    %vm336 = vmor %vm334, %vm335
    %v337 = vsel %vm336, %v329, %v333
    %v338 = vand.u32 2147483647, %v328
    %vm339 = vcmp.eq.f32.partialorder %v338, 8.507059e+37
    %v340 = vand.u32 %v328, 2147483648
    %v341 = vor.u32 1.1754944e-38, %v340
    %v342 = vsel %vm339, %v341, %v337
    %v343 = vmul.f32 1.0, %v342
    %v344 = vtanh.pop %v324
    %v346 = vrot.slane %v288, 6
    %v348 = vmul.f32 %v343, %v346
    %350 = vrot.lane.b32.xlu0 %v344, 64
    %v351 = vpop.permute.xlu0 %350
    %v353 = vmul.f32 %v343, %v351
    %355 = vrot.lane.b32.xlu0 %v353, 32
    %v356 = vpop.permute.xlu0 %355
    %v358 = vadd.f32 %v348, %v356
    %v359 = vtanh.pop %v358
    %361 = vrot.lane.b32.xlu0 %v359, 64
    %v362 = vpop.permute.xlu0 %361
    %v364 = vmul.f32 %v343, %v362
    %v366 = vrot.slane %v364, 6
    %367 = vrot.lane.b32.xlu0 %v366, 32
    %v368 = vpop.permute.xlu0 %367
    %v369 = vsel %vm94, %v368, 0
    %371 = vmatpush.msra.mxu0 0.0
    %372 = vmatpush.msra.mxu0 0.0
    %373 = vmatpush.msra.mxu0 0.0
    %374 = vmatpush.msra.mxu0 0.0
    %375 = vmatpush.msra.mxu0 0.0
    %376 = vmatpush.msra.mxu0 0.0
    %377 = vmatpush.msra.mxu0 0.0
    %378 = vmatpush.msra.mxu0 0.0
    %379 = vmatpush.msra.mxu0 0.0
    %380 = vmatpush.msra.mxu0 0.0
    %381 = vmatpush.msra.mxu0 0.0
    %382 = vmatpush.msra.mxu0 0.0
    %383 = vmatpush.msra.mxu0 %v93
    %384 = vmatpush.msra.mxu0 %v92
    %385 = vmatpush.msra.mxu0 %v91
    %386 = vmatpush.msra.mxu0 %v90
    %387 = vmatmul.f32.gmra.mxu0 %v369
    %v388 = vpop.f32.mrf.mxu0
    %v389 = vadd.f32 0.0, %v388
    %390 = vdwg.mxu0
    %v391 = vadd.f32 %v89, %v389
    %v392 = vxor.u32 %v391, 2147483648
    %v393 = vmul.f32 %v392, 1.442695
    %v394 = vpow.pop %v393
    %v395 = vadd.f32 %v394, 1.0
    %v396 = vrcp.pop %v395
    %v397 = vmul.f32 %v395, %v396
    %v398 = vsub.f32 1.0, %v397
    %v399 = vmul.f32 %v396, %v398
    %v400 = vadd.f32 %v396, %v399
    %vm401 = vweird.f32 %v395
    %vm402 = vweird.f32 %v396
    %vm403 = vmor %vm401, %vm402
    %v404 = vsel %vm403, %v396, %v400
    %v405 = vand.u32 2147483647, %v395
    %vm406 = vcmp.eq.f32.partialorder %v405, 8.507059e+37
    %v407 = vand.u32 %v395, 2147483648
    %v408 = vor.u32 1.1754944e-38, %v407
    %v409 = vsel %vm406, %v408, %v404
    %v410 = vmul.f32 1.0, %v409
    %v411 = vtanh.pop %v391
    %v413 = vrot.slane %v358, 6
    %v415 = vmul.f32 %v410, %v413
    %417 = vrot.lane.b32.xlu0 %v411, 64
    %v418 = vpop.permute.xlu0 %417
    %v420 = vmul.f32 %v410, %v418
    %422 = vrot.lane.b32.xlu0 %v420, 32
    %v423 = vpop.permute.xlu0 %422
    %v425 = vadd.f32 %v415, %v423
    %v426 = vtanh.pop %v425
    %428 = vrot.lane.b32.xlu0 %v426, 64
    %v429 = vpop.permute.xlu0 %428
    %v431 = vmul.f32 %v410, %v429
    %433 = vrot.lane.b32.xlu0 %v431, 32
    %v434 = vpop.permute.xlu0 %433
    %v435 = vsel %vm94, %v434, 0
    %437 = vmatpush.msra.mxu0 0.0
    %438 = vmatpush.msra.mxu0 0.0
    %439 = vmatpush.msra.mxu0 0.0
    %440 = vmatpush.msra.mxu0 0.0
    %441 = vmatpush.msra.mxu0 0.0
    %442 = vmatpush.msra.mxu0 0.0
    %443 = vmatpush.msra.mxu0 0.0
    %444 = vmatpush.msra.mxu0 0.0
    %445 = vmatpush.msra.mxu0 0.0
    %446 = vmatpush.msra.mxu0 0.0
    %447 = vmatpush.msra.mxu0 0.0
    %448 = vmatpush.msra.mxu0 0.0
    %449 = vmatpush.msra.mxu0 %v93
    %450 = vmatpush.msra.mxu0 %v92
    %451 = vmatpush.msra.mxu0 %v91
    %452 = vmatpush.msra.mxu0 %v90
    %453 = vmatmul.f32.gmra.mxu0 %v435
    %v454 = vpop.f32.mrf.mxu0
    %v455 = vadd.f32 0.0, %v454
    %456 = vdwg.mxu0
    %v458 = vrot.slane %v455, 6
    %v460 = vadd.f32 %v89, %v458
    %v461 = vxor.u32 %v460, 2147483648
    %v462 = vmul.f32 %v461, 1.442695
    %v463 = vpow.pop %v462
    %v464 = vadd.f32 %v463, 1.0
    %v465 = vrcp.pop %v464
    %v466 = vmul.f32 %v464, %v465
    %v467 = vsub.f32 1.0, %v466
    %v468 = vmul.f32 %v465, %v467
    %v469 = vadd.f32 %v465, %v468
    %vm470 = vweird.f32 %v464
    %vm471 = vweird.f32 %v465
    %vm472 = vmor %vm470, %vm471
    %v473 = vsel %vm472, %v465, %v469
    %v474 = vand.u32 2147483647, %v464
    %vm475 = vcmp.eq.f32.partialorder %v474, 8.507059e+37
    %v476 = vand.u32 %v464, 2147483648
    %v477 = vor.u32 1.1754944e-38, %v476
    %v478 = vsel %vm475, %v477, %v473
    %v479 = vmul.f32 1.0, %v478
    %v480 = vtanh.pop %v460
    %v482 = vrot.slane %v425, 6
    %v484 = vmul.f32 %v479, %v482
    %486 = vrot.lane.b32.xlu0 %v480, 64
    %v487 = vpop.permute.xlu0 %486
    %v489 = vmul.f32 %v479, %v487
    %491 = vrot.lane.b32.xlu0 %v489, 32
    %v492 = vpop.permute.xlu0 %491
    %v494 = vadd.f32 %v484, %v492
    %v495 = vtanh.pop %v494
    %497 = vrot.lane.b32.xlu0 %v495, 64
    %v498 = vpop.permute.xlu0 %497
    %v500 = vmul.f32 %v479, %v498
    %v502 = vrot.slane %v500, 2
    %503 = vrot.lane.b32.xlu0 %v502, 32
    %v504 = vpop.permute.xlu0 %503
    %v505 = vsel %vm94, %v504, 0
    %507 = vmatpush.msra.mxu0 0.0
    %508 = vmatpush.msra.mxu0 0.0
    %509 = vmatpush.msra.mxu0 0.0
    %510 = vmatpush.msra.mxu0 0.0
    %511 = vmatpush.msra.mxu0 0.0
    %512 = vmatpush.msra.mxu0 0.0
    %513 = vmatpush.msra.mxu0 0.0
    %514 = vmatpush.msra.mxu0 0.0
    %515 = vmatpush.msra.mxu0 0.0
    %516 = vmatpush.msra.mxu0 0.0
    %517 = vmatpush.msra.mxu0 0.0
    %518 = vmatpush.msra.mxu0 0.0
    %519 = vmatpush.msra.mxu0 %v93
    %520 = vmatpush.msra.mxu0 %v92
    %521 = vmatpush.msra.mxu0 %v91
    %522 = vmatpush.msra.mxu0 %v90
    %523 = vmatmul.f32.gmra.mxu0 %v505
    %v524 = vpop.f32.mrf.mxu0
    %v525 = vadd.f32 0.0, %v524
    %526 = vdwg.mxu0
    %v528 = vrot.slane %v525, 4
    %v530 = vadd.f32 %v89, %v528
    %v531 = vxor.u32 %v530, 2147483648
    %v532 = vmul.f32 %v531, 1.442695
    %v533 = vpow.pop %v532
    %v534 = vadd.f32 %v533, 1.0
    %v535 = vrcp.pop %v534
    %v536 = vmul.f32 %v534, %v535
    %v537 = vsub.f32 1.0, %v536
    %v538 = vmul.f32 %v535, %v537
    %v539 = vadd.f32 %v535, %v538
    %vm540 = vweird.f32 %v534
    %vm541 = vweird.f32 %v535
    %vm542 = vmor %vm540, %vm541
    %v543 = vsel %vm542, %v535, %v539
    %v544 = vand.u32 2147483647, %v534
    %vm545 = vcmp.eq.f32.partialorder %v544, 8.507059e+37
    %v546 = vand.u32 %v534, 2147483648
    %v547 = vor.u32 1.1754944e-38, %v546
    %v548 = vsel %vm545, %v547, %v543
    %v549 = vmul.f32 1.0, %v548
    %v550 = vtanh.pop %v530
    %v552 = vrot.slane %v494, 6
    %v554 = vmul.f32 %v549, %v552
    %556 = vrot.lane.b32.xlu0 %v550, 64
    %v557 = vpop.permute.xlu0 %556
    %v559 = vmul.f32 %v549, %v557
    %561 = vrot.lane.b32.xlu0 %v559, 32
    %v562 = vpop.permute.xlu0 %561
    %v564 = vadd.f32 %v554, %v562
    %v565 = vtanh.pop %v564
    %567 = vrot.lane.b32.xlu0 %v565, 64
    %v568 = vpop.permute.xlu0 %567
    %v570 = vmul.f32 %v549, %v568
    %v572 = vrot.slane %v570, 4
    %573 = vrot.lane.b32.xlu0 %v572, 32
    %v574 = vpop.permute.xlu0 %573
    %v575 = vsel %vm94, %v574, 0
    %577 = vmatpush.msra.mxu0 0.0
    %578 = vmatpush.msra.mxu0 0.0
    %579 = vmatpush.msra.mxu0 0.0
    %580 = vmatpush.msra.mxu0 0.0
    %581 = vmatpush.msra.mxu0 0.0
    %582 = vmatpush.msra.mxu0 0.0
    %583 = vmatpush.msra.mxu0 0.0
    %584 = vmatpush.msra.mxu0 0.0
    %585 = vmatpush.msra.mxu0 0.0
    %586 = vmatpush.msra.mxu0 0.0
    %587 = vmatpush.msra.mxu0 0.0
    %588 = vmatpush.msra.mxu0 0.0
    %589 = vmatpush.msra.mxu0 %v93
    %590 = vmatpush.msra.mxu0 %v92
    %591 = vmatpush.msra.mxu0 %v91
    %592 = vmatpush.msra.mxu0 %v90
    %593 = vmatmul.f32.gmra.mxu0 %v575
    %v594 = vpop.f32.mrf.mxu0
    %v595 = vadd.f32 0.0, %v594
    %596 = vdwg.mxu0
    %v598 = vrot.slane %v595, 2
    %v600 = vadd.f32 %v89, %v598
    %v601 = vxor.u32 %v600, 2147483648
    %v602 = vmul.f32 %v601, 1.442695
    %v603 = vpow.pop %v602
    %v604 = vadd.f32 %v603, 1.0
    %v605 = vrcp.pop %v604
    %v606 = vmul.f32 %v604, %v605
    %v607 = vsub.f32 1.0, %v606
    %v608 = vmul.f32 %v605, %v607
    %v609 = vadd.f32 %v605, %v608
    %vm610 = vweird.f32 %v604
    %vm611 = vweird.f32 %v605
    %vm612 = vmor %vm610, %vm611
    %v613 = vsel %vm612, %v605, %v609
    %v614 = vand.u32 2147483647, %v604
    %vm615 = vcmp.eq.f32.partialorder %v614, 8.507059e+37
    %v616 = vand.u32 %v604, 2147483648
    %v617 = vor.u32 1.1754944e-38, %v616
    %v618 = vsel %vm615, %v617, %v613
    %v619 = vmul.f32 1.0, %v618
    %v620 = vtanh.pop %v600
    %v622 = vrot.slane %v564, 6
    %v624 = vmul.f32 %v619, %v622
    %626 = vrot.lane.b32.xlu0 %v620, 64
    %v627 = vpop.permute.xlu0 %626
    %v629 = vmul.f32 %v619, %v627
    %631 = vrot.lane.b32.xlu0 %v629, 32
    %v632 = vpop.permute.xlu0 %631
    %v634 = vadd.f32 %v624, %v632
    %v635 = vtanh.pop %v634
    %637 = vrot.lane.b32.xlu0 %v635, 64
    %v638 = vpop.permute.xlu0 %637
    %v640 = vmul.f32 %v619, %v638
    %v641 = vld [vmem:[#allocation3] sm:$0xff]
    %v642 = vld [vmem:[#allocation3 + $0x8] sm:$0xff]
    %v643 = vld [vmem:[#allocation3 + $0x10] sm:$0xff]
    %v644 = vld [vmem:[#allocation3 + $0x18] sm:$0xff]
    %v645 = vld [vmem:[#allocation5] sm:$0xff]
    %v646 = vld [vmem:[#allocation5 + $0x8] sm:$0xff]
    %v647 = vld [vmem:[#allocation5 + $0x10] sm:$0xff]
    %v648 = vld [vmem:[#allocation5 + $0x18] sm:$0xff]
    %v649 = vld [vmem:[%s6] sm:$0x1]
    %v651 = vperm.slane %v649, 0
    %653 = vmatpush.msra.mxu0 0.0
    %654 = vmatpush.msra.mxu0 0.0
    %655 = vmatpush.msra.mxu0 0.0
    %656 = vmatpush.msra.mxu0 0.0
    %657 = vmatpush.msra.mxu0 0.0
    %658 = vmatpush.msra.mxu0 0.0
    %659 = vmatpush.msra.mxu0 0.0
    %660 = vmatpush.msra.mxu0 0.0
    %661 = vmatpush.msra.mxu0 0.0
    %662 = vmatpush.msra.mxu0 0.0
    %663 = vmatpush.msra.mxu0 0.0
    %664 = vmatpush.msra.mxu0 0.0
    %665 = vmatpush.msra.mxu0 %v644
    %666 = vmatpush.msra.mxu0 %v643
    %667 = vmatpush.msra.mxu0 %v642
    %668 = vmatpush.msra.mxu0 %v641
    %669 = vmatmul.f32.gmra.mxu0 %v159
    %v670 = vpop.f32.mrf.mxu0
    %v671 = vadd.f32 %v651, %v670
    %672 = vdwg.mxu0
    %673 = vmatpush.msra.mxu0 0.0
    %674 = vmatpush.msra.mxu0 0.0
    %675 = vmatpush.msra.mxu0 0.0
    %676 = vmatpush.msra.mxu0 0.0
    %677 = vmatpush.msra.mxu0 0.0
    %678 = vmatpush.msra.mxu0 0.0
    %679 = vmatpush.msra.mxu0 0.0
    %680 = vmatpush.msra.mxu0 0.0
    %681 = vmatpush.msra.mxu0 0.0
    %682 = vmatpush.msra.mxu0 0.0
    %683 = vmatpush.msra.mxu0 0.0
    %684 = vmatpush.msra.mxu0 0.0
    %685 = vmatpush.msra.mxu0 %v648
    %686 = vmatpush.msra.mxu0 %v647
    %687 = vmatpush.msra.mxu0 %v646
    %688 = vmatpush.msra.mxu0 %v645
    %689 = vmatmul.f32.gmra.mxu0 %v96
    %v690 = vpop.f32.mrf.mxu0
    %v691 = vadd.f32 0.0, %v690
    %692 = vdwg.mxu0
    %v693 = vadd.f32 %v671, %v691
    %v694 = vxor.u32 %v693, 2147483648
    %v695 = vmul.f32 %v694, 1.442695
    %v696 = vpow.pop %v695
    %v697 = vadd.f32 %v696, 1.0
    %v698 = vrcp.pop %v697
    %v699 = vmul.f32 %v697, %v698
    %v700 = vsub.f32 1.0, %v699
    %v701 = vmul.f32 %v698, %v700
    %v702 = vadd.f32 %v698, %v701
    %vm703 = vweird.f32 %v697
    %vm704 = vweird.f32 %v698
    %vm705 = vmor %vm703, %vm704
    %v706 = vsel %vm705, %v698, %v702
    %v707 = vand.u32 2147483647, %v697
    %vm708 = vcmp.eq.f32.partialorder %v707, 8.507059e+37
    %v709 = vand.u32 %v697, 2147483648
    %v710 = vor.u32 1.1754944e-38, %v709
    %v711 = vsel %vm708, %v710, %v706
    %v712 = vmul.f32 1.0, %v711
    %v713 = vtanh.pop %v693
    %v714 = vmul.f32 %v712, 0.0
    %716 = vrot.lane.b32.xlu0 %v713, 64
    %v717 = vpop.permute.xlu0 %716
    %v719 = vmul.f32 %v712, %v717
    %721 = vrot.lane.b32.xlu0 %v719, 32
    %v722 = vpop.permute.xlu0 %721
    %v724 = vadd.f32 %v714, %v722
    %v725 = vtanh.pop %v724
    %727 = vrot.lane.b32.xlu0 %v725, 64
    %v728 = vpop.permute.xlu0 %727
    %v730 = vmul.f32 %v712, %v728
    %731 = vmatpush.msra.mxu0 0.0
    %732 = vmatpush.msra.mxu0 0.0
    %733 = vmatpush.msra.mxu0 0.0
    %734 = vmatpush.msra.mxu0 0.0
    %735 = vmatpush.msra.mxu0 0.0
    %736 = vmatpush.msra.mxu0 0.0
    %737 = vmatpush.msra.mxu0 0.0
    %738 = vmatpush.msra.mxu0 0.0
    %739 = vmatpush.msra.mxu0 0.0
    %740 = vmatpush.msra.mxu0 0.0
    %741 = vmatpush.msra.mxu0 0.0
    %742 = vmatpush.msra.mxu0 0.0
    %743 = vmatpush.msra.mxu0 %v644
    %744 = vmatpush.msra.mxu0 %v643
    %745 = vmatpush.msra.mxu0 %v642
    %746 = vmatpush.msra.mxu0 %v641
    %747 = vmatmul.f32.gmra.mxu0 %v229
    %v748 = vpop.f32.mrf.mxu0
    %v749 = vadd.f32 %v651, %v748
    %750 = vdwg.mxu0
    %752 = vrot.lane.b32.xlu0 %v730, 32
    %v753 = vpop.permute.xlu0 %752
    %v754 = vsel %vm94, %v753, 0
    %756 = vmatpush.msra.mxu0 0.0
    %757 = vmatpush.msra.mxu0 0.0
    %758 = vmatpush.msra.mxu0 0.0
    %759 = vmatpush.msra.mxu0 0.0
    %760 = vmatpush.msra.mxu0 0.0
    %761 = vmatpush.msra.mxu0 0.0
    %762 = vmatpush.msra.mxu0 0.0
    %763 = vmatpush.msra.mxu0 0.0
    %764 = vmatpush.msra.mxu0 0.0
    %765 = vmatpush.msra.mxu0 0.0
    %766 = vmatpush.msra.mxu0 0.0
    %767 = vmatpush.msra.mxu0 0.0
    %768 = vmatpush.msra.mxu0 %v648
    %769 = vmatpush.msra.mxu0 %v647
    %770 = vmatpush.msra.mxu0 %v646
    %771 = vmatpush.msra.mxu0 %v645
    %772 = vmatmul.f32.gmra.mxu0 %v754
    %v773 = vpop.f32.mrf.mxu0
    %v774 = vadd.f32 0.0, %v773
    %775 = vdwg.mxu0
    %v776 = vadd.f32 %v749, %v774
    %v777 = vxor.u32 %v776, 2147483648
    %v778 = vmul.f32 %v777, 1.442695
    %v779 = vpow.pop %v778
    %v780 = vadd.f32 %v779, 1.0
    %v781 = vrcp.pop %v780
    %v782 = vmul.f32 %v780, %v781
    %v783 = vsub.f32 1.0, %v782
    %v784 = vmul.f32 %v781, %v783
    %v785 = vadd.f32 %v781, %v784
    %vm786 = vweird.f32 %v780
    %vm787 = vweird.f32 %v781
    %vm788 = vmor %vm786, %vm787
    %v789 = vsel %vm788, %v781, %v785
    %v790 = vand.u32 2147483647, %v780
    %vm791 = vcmp.eq.f32.partialorder %v790, 8.507059e+37
    %v792 = vand.u32 %v780, 2147483648
    %v793 = vor.u32 1.1754944e-38, %v792
    %v794 = vsel %vm791, %v793, %v789
    %v795 = vmul.f32 1.0, %v794
    %v796 = vtanh.pop %v776
    %v797 = vmul.f32 %v795, %v724
    %799 = vrot.lane.b32.xlu0 %v796, 64
    %v800 = vpop.permute.xlu0 %799
    %v802 = vmul.f32 %v795, %v800
    %804 = vrot.lane.b32.xlu0 %v802, 32
    %v805 = vpop.permute.xlu0 %804
    %v807 = vadd.f32 %v797, %v805
    %v808 = vtanh.pop %v807
    %810 = vrot.lane.b32.xlu0 %v808, 64
    %v811 = vpop.permute.xlu0 %810
    %v813 = vmul.f32 %v795, %v811
    %814 = vmatpush.msra.mxu0 0.0
    %815 = vmatpush.msra.mxu0 0.0
    %816 = vmatpush.msra.mxu0 0.0
    %817 = vmatpush.msra.mxu0 0.0
    %818 = vmatpush.msra.mxu0 0.0
    %819 = vmatpush.msra.mxu0 0.0
    %820 = vmatpush.msra.mxu0 0.0
    %821 = vmatpush.msra.mxu0 0.0
    %822 = vmatpush.msra.mxu0 0.0
    %823 = vmatpush.msra.mxu0 0.0
    %824 = vmatpush.msra.mxu0 0.0
    %825 = vmatpush.msra.mxu0 0.0
    %826 = vmatpush.msra.mxu0 %v644
    %827 = vmatpush.msra.mxu0 %v643
    %828 = vmatpush.msra.mxu0 %v642
    %829 = vmatpush.msra.mxu0 %v641
    %830 = vmatmul.f32.gmra.mxu0 %v299
    %v831 = vpop.f32.mrf.mxu0
    %v832 = vadd.f32 %v651, %v831
    %833 = vdwg.mxu0
    %835 = vrot.lane.b32.xlu0 %v813, 32
    %v836 = vpop.permute.xlu0 %835
    %v837 = vsel %vm94, %v836, 0
    %839 = vmatpush.msra.mxu0 0.0
    %840 = vmatpush.msra.mxu0 0.0
    %841 = vmatpush.msra.mxu0 0.0
    %842 = vmatpush.msra.mxu0 0.0
    %843 = vmatpush.msra.mxu0 0.0
    %844 = vmatpush.msra.mxu0 0.0
    %845 = vmatpush.msra.mxu0 0.0
    %846 = vmatpush.msra.mxu0 0.0
    %847 = vmatpush.msra.mxu0 0.0
    %848 = vmatpush.msra.mxu0 0.0
    %849 = vmatpush.msra.mxu0 0.0
    %850 = vmatpush.msra.mxu0 0.0
    %851 = vmatpush.msra.mxu0 %v648
    %852 = vmatpush.msra.mxu0 %v647
    %853 = vmatpush.msra.mxu0 %v646
    %854 = vmatpush.msra.mxu0 %v645
    %855 = vmatmul.f32.gmra.mxu0 %v837
    %v856 = vpop.f32.mrf.mxu0
    %v857 = vadd.f32 0.0, %v856
    %858 = vdwg.mxu0
    %v859 = vadd.f32 %v832, %v857
    %v860 = vxor.u32 %v859, 2147483648
    %v861 = vmul.f32 %v860, 1.442695
    %v862 = vpow.pop %v861
    %v863 = vadd.f32 %v862, 1.0
    %v864 = vrcp.pop %v863
    %v865 = vmul.f32 %v863, %v864
    %v866 = vsub.f32 1.0, %v865
    %v867 = vmul.f32 %v864, %v866
    %v868 = vadd.f32 %v864, %v867
    %vm869 = vweird.f32 %v863
    %vm870 = vweird.f32 %v864
    %vm871 = vmor %vm869, %vm870
    %v872 = vsel %vm871, %v864, %v868
    %v873 = vand.u32 2147483647, %v863
    %vm874 = vcmp.eq.f32.partialorder %v873, 8.507059e+37
    %v875 = vand.u32 %v863, 2147483648
    %v876 = vor.u32 1.1754944e-38, %v875
    %v877 = vsel %vm874, %v876, %v872
    %v878 = vmul.f32 1.0, %v877
    %v879 = vtanh.pop %v859
    %v880 = vmul.f32 %v878, %v807
    %882 = vrot.lane.b32.xlu0 %v879, 64
    %v883 = vpop.permute.xlu0 %882
    %v885 = vmul.f32 %v878, %v883
    %887 = vrot.lane.b32.xlu0 %v885, 32
    %v888 = vpop.permute.xlu0 %887
    %v890 = vadd.f32 %v880, %v888
    %v891 = vtanh.pop %v890
    %893 = vrot.lane.b32.xlu0 %v891, 64
    %v894 = vpop.permute.xlu0 %893
    %v896 = vmul.f32 %v878, %v894
    %897 = vmatpush.msra.mxu0 0.0
    %898 = vmatpush.msra.mxu0 0.0
    %899 = vmatpush.msra.mxu0 0.0
    %900 = vmatpush.msra.mxu0 0.0
    %901 = vmatpush.msra.mxu0 0.0
    %902 = vmatpush.msra.mxu0 0.0
    %903 = vmatpush.msra.mxu0 0.0
    %904 = vmatpush.msra.mxu0 0.0
    %905 = vmatpush.msra.mxu0 0.0
    %906 = vmatpush.msra.mxu0 0.0
    %907 = vmatpush.msra.mxu0 0.0
    %908 = vmatpush.msra.mxu0 0.0
    %909 = vmatpush.msra.mxu0 %v644
    %910 = vmatpush.msra.mxu0 %v643
    %911 = vmatpush.msra.mxu0 %v642
    %912 = vmatpush.msra.mxu0 %v641
    %913 = vmatmul.f32.gmra.mxu0 %v369
    %v914 = vpop.f32.mrf.mxu0
    %v915 = vadd.f32 %v651, %v914
    %916 = vdwg.mxu0
    %918 = vrot.lane.b32.xlu0 %v896, 32
    %v919 = vpop.permute.xlu0 %918
    %v920 = vsel %vm94, %v919, 0
    %922 = vmatpush.msra.mxu0 0.0
    %923 = vmatpush.msra.mxu0 0.0
    %924 = vmatpush.msra.mxu0 0.0
    %925 = vmatpush.msra.mxu0 0.0
    %926 = vmatpush.msra.mxu0 0.0
    %927 = vmatpush.msra.mxu0 0.0
    %928 = vmatpush.msra.mxu0 0.0
    %929 = vmatpush.msra.mxu0 0.0
    %930 = vmatpush.msra.mxu0 0.0
    %931 = vmatpush.msra.mxu0 0.0
    %932 = vmatpush.msra.mxu0 0.0
    %933 = vmatpush.msra.mxu0 0.0
    %934 = vmatpush.msra.mxu0 %v648
    %935 = vmatpush.msra.mxu0 %v647
    %936 = vmatpush.msra.mxu0 %v646
    %937 = vmatpush.msra.mxu0 %v645
    %938 = vmatmul.f32.gmra.mxu0 %v920
    %v939 = vpop.f32.mrf.mxu0
    %v940 = vadd.f32 0.0, %v939
    %941 = vdwg.mxu0
    %v942 = vadd.f32 %v915, %v940
    %v943 = vxor.u32 %v942, 2147483648
    %v944 = vmul.f32 %v943, 1.442695
    %v945 = vpow.pop %v944
    %v946 = vadd.f32 %v945, 1.0
    %v947 = vrcp.pop %v946
    %v948 = vmul.f32 %v946, %v947
    %v949 = vsub.f32 1.0, %v948
    %v950 = vmul.f32 %v947, %v949
    %v951 = vadd.f32 %v947, %v950
    %vm952 = vweird.f32 %v946
    %vm953 = vweird.f32 %v947
    %vm954 = vmor %vm952, %vm953
    %v955 = vsel %vm954, %v947, %v951
    %v956 = vand.u32 2147483647, %v946
    %vm957 = vcmp.eq.f32.partialorder %v956, 8.507059e+37
    %v958 = vand.u32 %v946, 2147483648
    %v959 = vor.u32 1.1754944e-38, %v958
    %v960 = vsel %vm957, %v959, %v955
    %v961 = vmul.f32 1.0, %v960
    %v962 = vtanh.pop %v942
    %v963 = vmul.f32 %v961, %v890
    %965 = vrot.lane.b32.xlu0 %v962, 64
    %v966 = vpop.permute.xlu0 %965
    %v968 = vmul.f32 %v961, %v966
    %970 = vrot.lane.b32.xlu0 %v968, 32
    %v971 = vpop.permute.xlu0 %970
    %v973 = vadd.f32 %v963, %v971
    %v974 = vtanh.pop %v973
    %976 = vrot.lane.b32.xlu0 %v974, 64
    %v977 = vpop.permute.xlu0 %976
    %v979 = vmul.f32 %v961, %v977
    %980 = vmatpush.msra.mxu0 0.0
    %981 = vmatpush.msra.mxu0 0.0
    %982 = vmatpush.msra.mxu0 0.0
    %983 = vmatpush.msra.mxu0 0.0
    %984 = vmatpush.msra.mxu0 0.0
    %985 = vmatpush.msra.mxu0 0.0
    %986 = vmatpush.msra.mxu0 0.0
    %987 = vmatpush.msra.mxu0 0.0
    %988 = vmatpush.msra.mxu0 0.0
    %989 = vmatpush.msra.mxu0 0.0
    %990 = vmatpush.msra.mxu0 0.0
    %991 = vmatpush.msra.mxu0 0.0
    %992 = vmatpush.msra.mxu0 %v644
    %993 = vmatpush.msra.mxu0 %v643
    %994 = vmatpush.msra.mxu0 %v642
    %995 = vmatpush.msra.mxu0 %v641
    %996 = vmatmul.f32.gmra.mxu0 %v435
    %v997 = vpop.f32.mrf.mxu0
    %v998 = vadd.f32 %v651, %v997
    %999 = vdwg.mxu0
    %1001 = vrot.lane.b32.xlu0 %v979, 32
    %v1002 = vpop.permute.xlu0 %1001
    %v1003 = vsel %vm94, %v1002, 0
    %1005 = vmatpush.msra.mxu0 0.0
    %1006 = vmatpush.msra.mxu0 0.0
    %1007 = vmatpush.msra.mxu0 0.0
    %1008 = vmatpush.msra.mxu0 0.0
    %1009 = vmatpush.msra.mxu0 0.0
    %1010 = vmatpush.msra.mxu0 0.0
    %1011 = vmatpush.msra.mxu0 0.0
    %1012 = vmatpush.msra.mxu0 0.0
    %1013 = vmatpush.msra.mxu0 0.0
    %1014 = vmatpush.msra.mxu0 0.0
    %1015 = vmatpush.msra.mxu0 0.0
    %1016 = vmatpush.msra.mxu0 0.0
    %1017 = vmatpush.msra.mxu0 %v648
    %1018 = vmatpush.msra.mxu0 %v647
    %1019 = vmatpush.msra.mxu0 %v646
    %1020 = vmatpush.msra.mxu0 %v645
    %1021 = vmatmul.f32.gmra.mxu0 %v1003
    %v1022 = vpop.f32.mrf.mxu0
    %v1023 = vadd.f32 0.0, %v1022
    %1024 = vdwg.mxu0
    %v1025 = vadd.f32 %v998, %v1023
    %v1026 = vxor.u32 %v1025, 2147483648
    %v1027 = vmul.f32 %v1026, 1.442695
    %v1028 = vpow.pop %v1027
    %v1029 = vadd.f32 %v1028, 1.0
    %v1030 = vrcp.pop %v1029
    %v1031 = vmul.f32 %v1029, %v1030
    %v1032 = vsub.f32 1.0, %v1031
    %v1033 = vmul.f32 %v1030, %v1032
    %v1034 = vadd.f32 %v1030, %v1033
    %vm1035 = vweird.f32 %v1029
    %vm1036 = vweird.f32 %v1030
    %vm1037 = vmor %vm1035, %vm1036
    %v1038 = vsel %vm1037, %v1030, %v1034
    %v1039 = vand.u32 2147483647, %v1029
    %vm1040 = vcmp.eq.f32.partialorder %v1039, 8.507059e+37
    %v1041 = vand.u32 %v1029, 2147483648
    %v1042 = vor.u32 1.1754944e-38, %v1041
    %v1043 = vsel %vm1040, %v1042, %v1038
    %v1044 = vmul.f32 1.0, %v1043
    %v1045 = vtanh.pop %v1025
    %v1046 = vmul.f32 %v1044, %v973
    %1048 = vrot.lane.b32.xlu0 %v1045, 64
    %v1049 = vpop.permute.xlu0 %1048
    %v1051 = vmul.f32 %v1044, %v1049
    %1053 = vrot.lane.b32.xlu0 %v1051, 32
    %v1054 = vpop.permute.xlu0 %1053
    %v1056 = vadd.f32 %v1046, %v1054
    %v1057 = vtanh.pop %v1056
    %1059 = vrot.lane.b32.xlu0 %v1057, 64
    %v1060 = vpop.permute.xlu0 %1059
    %v1062 = vmul.f32 %v1044, %v1060
    %1063 = vmatpush.msra.mxu0 0.0
    %1064 = vmatpush.msra.mxu0 0.0
    %1065 = vmatpush.msra.mxu0 0.0
    %1066 = vmatpush.msra.mxu0 0.0
    %1067 = vmatpush.msra.mxu0 0.0
    %1068 = vmatpush.msra.mxu0 0.0
    %1069 = vmatpush.msra.mxu0 0.0
    %1070 = vmatpush.msra.mxu0 0.0
    %1071 = vmatpush.msra.mxu0 0.0
    %1072 = vmatpush.msra.mxu0 0.0
    %1073 = vmatpush.msra.mxu0 0.0
    %1074 = vmatpush.msra.mxu0 0.0
    %1075 = vmatpush.msra.mxu0 %v644
    %1076 = vmatpush.msra.mxu0 %v643
    %1077 = vmatpush.msra.mxu0 %v642
    %1078 = vmatpush.msra.mxu0 %v641
    %1079 = vmatmul.f32.gmra.mxu0 %v505
    %v1080 = vpop.f32.mrf.mxu0
    %v1081 = vadd.f32 %v651, %v1080
    %1082 = vdwg.mxu0
    %1084 = vrot.lane.b32.xlu0 %v1062, 32
    %v1085 = vpop.permute.xlu0 %1084
    %v1086 = vsel %vm94, %v1085, 0
    %1088 = vmatpush.msra.mxu0 0.0
    %1089 = vmatpush.msra.mxu0 0.0
    %1090 = vmatpush.msra.mxu0 0.0
    %1091 = vmatpush.msra.mxu0 0.0
    %1092 = vmatpush.msra.mxu0 0.0
    %1093 = vmatpush.msra.mxu0 0.0
    %1094 = vmatpush.msra.mxu0 0.0
    %1095 = vmatpush.msra.mxu0 0.0
    %1096 = vmatpush.msra.mxu0 0.0
    %1097 = vmatpush.msra.mxu0 0.0
    %1098 = vmatpush.msra.mxu0 0.0
    %1099 = vmatpush.msra.mxu0 0.0
    %1100 = vmatpush.msra.mxu0 %v648
    %1101 = vmatpush.msra.mxu0 %v647
    %1102 = vmatpush.msra.mxu0 %v646
    %1103 = vmatpush.msra.mxu0 %v645
    %1104 = vmatmul.f32.gmra.mxu0 %v1086
    %v1105 = vpop.f32.mrf.mxu0
    %v1106 = vadd.f32 0.0, %v1105
    %1107 = vdwg.mxu0
    %v1108 = vadd.f32 %v1081, %v1106
    %v1109 = vxor.u32 %v1108, 2147483648
    %v1110 = vmul.f32 %v1109, 1.442695
    %v1111 = vpow.pop %v1110
    %v1112 = vadd.f32 %v1111, 1.0
    %v1113 = vrcp.pop %v1112
    %v1114 = vmul.f32 %v1112, %v1113
    %v1115 = vsub.f32 1.0, %v1114
    %v1116 = vmul.f32 %v1113, %v1115
    %v1117 = vadd.f32 %v1113, %v1116
    %vm1118 = vweird.f32 %v1112
    %vm1119 = vweird.f32 %v1113
    %vm1120 = vmor %vm1118, %vm1119
    %v1121 = vsel %vm1120, %v1113, %v1117
    %v1122 = vand.u32 2147483647, %v1112
    %vm1123 = vcmp.eq.f32.partialorder %v1122, 8.507059e+37
    %v1124 = vand.u32 %v1112, 2147483648
    %v1125 = vor.u32 1.1754944e-38, %v1124
    %v1126 = vsel %vm1123, %v1125, %v1121
    %v1127 = vmul.f32 1.0, %v1126
    %v1128 = vtanh.pop %v1108
    %v1129 = vmul.f32 %v1127, %v1056
    %1131 = vrot.lane.b32.xlu0 %v1128, 64
    %v1132 = vpop.permute.xlu0 %1131
    %v1134 = vmul.f32 %v1127, %v1132
    %1136 = vrot.lane.b32.xlu0 %v1134, 32
    %v1137 = vpop.permute.xlu0 %1136
    %v1139 = vadd.f32 %v1129, %v1137
    %v1140 = vtanh.pop %v1139
    %1142 = vrot.lane.b32.xlu0 %v1140, 64
    %v1143 = vpop.permute.xlu0 %1142
    %v1145 = vmul.f32 %v1127, %v1143
    %1146 = vmatpush.msra.mxu0 0.0
    %1147 = vmatpush.msra.mxu0 0.0
    %1148 = vmatpush.msra.mxu0 0.0
    %1149 = vmatpush.msra.mxu0 0.0
    %1150 = vmatpush.msra.mxu0 0.0
    %1151 = vmatpush.msra.mxu0 0.0
    %1152 = vmatpush.msra.mxu0 0.0
    %1153 = vmatpush.msra.mxu0 0.0
    %1154 = vmatpush.msra.mxu0 0.0
    %1155 = vmatpush.msra.mxu0 0.0
    %1156 = vmatpush.msra.mxu0 0.0
    %1157 = vmatpush.msra.mxu0 0.0
    %1158 = vmatpush.msra.mxu0 %v644
    %1159 = vmatpush.msra.mxu0 %v643
    %1160 = vmatpush.msra.mxu0 %v642
    %1161 = vmatpush.msra.mxu0 %v641
    %1162 = vmatmul.f32.gmra.mxu0 %v575
    %v1163 = vpop.f32.mrf.mxu0
    %v1164 = vadd.f32 %v651, %v1163
    %1165 = vdwg.mxu0
    %1167 = vrot.lane.b32.xlu0 %v1145, 32
    %v1168 = vpop.permute.xlu0 %1167
    %v1169 = vsel %vm94, %v1168, 0
    %1171 = vmatpush.msra.mxu0 0.0
    %1172 = vmatpush.msra.mxu0 0.0
    %1173 = vmatpush.msra.mxu0 0.0
    %1174 = vmatpush.msra.mxu0 0.0
    %1175 = vmatpush.msra.mxu0 0.0
    %1176 = vmatpush.msra.mxu0 0.0
    %1177 = vmatpush.msra.mxu0 0.0
    %1178 = vmatpush.msra.mxu0 0.0
    %1179 = vmatpush.msra.mxu0 0.0
    %1180 = vmatpush.msra.mxu0 0.0
    %1181 = vmatpush.msra.mxu0 0.0
    %1182 = vmatpush.msra.mxu0 0.0
    %1183 = vmatpush.msra.mxu0 %v648
    %1184 = vmatpush.msra.mxu0 %v647
    %1185 = vmatpush.msra.mxu0 %v646
    %1186 = vmatpush.msra.mxu0 %v645
    %1187 = vmatmul.f32.gmra.mxu0 %v1169
    %v1188 = vpop.f32.mrf.mxu0
    %v1189 = vadd.f32 0.0, %v1188
    %1190 = vdwg.mxu0
    %v1191 = vadd.f32 %v1164, %v1189
    %v1192 = vxor.u32 %v1191, 2147483648
    %v1193 = vmul.f32 %v1192, 1.442695
    %v1194 = vpow.pop %v1193
    %v1195 = vadd.f32 %v1194, 1.0
    %v1196 = vrcp.pop %v1195
    %v1197 = vmul.f32 %v1195, %v1196
    %v1198 = vsub.f32 1.0, %v1197
    %v1199 = vmul.f32 %v1196, %v1198
    %v1200 = vadd.f32 %v1196, %v1199
    %vm1201 = vweird.f32 %v1195
    %vm1202 = vweird.f32 %v1196
    %vm1203 = vmor %vm1201, %vm1202
    %v1204 = vsel %vm1203, %v1196, %v1200
    %v1205 = vand.u32 2147483647, %v1195
    %vm1206 = vcmp.eq.f32.partialorder %v1205, 8.507059e+37
    %v1207 = vand.u32 %v1195, 2147483648
    %v1208 = vor.u32 1.1754944e-38, %v1207
    %v1209 = vsel %vm1206, %v1208, %v1204
    %v1210 = vmul.f32 1.0, %v1209
    %v1211 = vtanh.pop %v1191
    %v1212 = vmul.f32 %v1210, %v1139
    %1214 = vrot.lane.b32.xlu0 %v1211, 64
    %v1215 = vpop.permute.xlu0 %1214
    %v1217 = vmul.f32 %v1210, %v1215
    %1219 = vrot.lane.b32.xlu0 %v1217, 32
    %v1220 = vpop.permute.xlu0 %1219
    %v1222 = vadd.f32 %v1212, %v1220
    %v1223 = vtanh.pop %v1222
    %1225 = vrot.lane.b32.xlu0 %v1223, 64
    %v1226 = vpop.permute.xlu0 %1225
    %v1228 = vmul.f32 %v1210, %v1226
    %v1230 = vrot.slane %v640, 6
    %1231 = vrot.lane.b32.xlu0 %v1230, 32
    %v1232 = vpop.permute.xlu0 %1231
    %v1233 = vsel %vm94, %v1232, 0
    %1235 = vmatpush.msra.mxu0 0.0
    %1236 = vmatpush.msra.mxu0 0.0
    %1237 = vmatpush.msra.mxu0 0.0
    %1238 = vmatpush.msra.mxu0 0.0
    %1239 = vmatpush.msra.mxu0 0.0
    %1240 = vmatpush.msra.mxu0 0.0
    %1241 = vmatpush.msra.mxu0 0.0
    %1242 = vmatpush.msra.mxu0 0.0
    %1243 = vmatpush.msra.mxu0 0.0
    %1244 = vmatpush.msra.mxu0 0.0
    %1245 = vmatpush.msra.mxu0 0.0
    %1246 = vmatpush.msra.mxu0 0.0
    %1247 = vmatpush.msra.mxu0 %v644
    %1248 = vmatpush.msra.mxu0 %v643
    %1249 = vmatpush.msra.mxu0 %v642
    %1250 = vmatpush.msra.mxu0 %v641
    %1251 = vmatmul.f32.gmra.mxu0 %v1233
    %v1252 = vpop.f32.mrf.mxu0
    %v1253 = vadd.f32 %v651, %v1252
    %1254 = vdwg.mxu0
    %1256 = vrot.lane.b32.xlu0 %v1228, 32
    %v1257 = vpop.permute.xlu0 %1256
    %v1258 = vsel %vm94, %v1257, 0
    %1260 = vmatpush.msra.mxu0 0.0
    %1261 = vmatpush.msra.mxu0 0.0
    %1262 = vmatpush.msra.mxu0 0.0
    %1263 = vmatpush.msra.mxu0 0.0
    %1264 = vmatpush.msra.mxu0 0.0
    %1265 = vmatpush.msra.mxu0 0.0
    %1266 = vmatpush.msra.mxu0 0.0
    %1267 = vmatpush.msra.mxu0 0.0
    %1268 = vmatpush.msra.mxu0 0.0
    %1269 = vmatpush.msra.mxu0 0.0
    %1270 = vmatpush.msra.mxu0 0.0
    %1271 = vmatpush.msra.mxu0 0.0
    %1272 = vmatpush.msra.mxu0 %v648
    %1273 = vmatpush.msra.mxu0 %v647
    %1274 = vmatpush.msra.mxu0 %v646
    %1275 = vmatpush.msra.mxu0 %v645
    %1276 = vmatmul.f32.gmra.mxu0 %v1258
    %v1277 = vpop.f32.mrf.mxu0
    %v1278 = vadd.f32 0.0, %v1277
    %1279 = vdwg.mxu0
    %v1280 = vadd.f32 %v1253, %v1278
    %v1281 = vxor.u32 %v1280, 2147483648
    %v1282 = vmul.f32 %v1281, 1.442695
    %v1283 = vpow.pop %v1282
    %v1284 = vadd.f32 %v1283, 1.0
    %v1285 = vrcp.pop %v1284
    %v1286 = vmul.f32 %v1284, %v1285
    %v1287 = vsub.f32 1.0, %v1286
    %v1288 = vmul.f32 %v1285, %v1287
    %v1289 = vadd.f32 %v1285, %v1288
    %vm1290 = vweird.f32 %v1284
    %vm1291 = vweird.f32 %v1285
    %vm1292 = vmor %vm1290, %vm1291
    %v1293 = vsel %vm1292, %v1285, %v1289
    %v1294 = vand.u32 2147483647, %v1284
    %vm1295 = vcmp.eq.f32.partialorder %v1294, 8.507059e+37
    %v1296 = vand.u32 %v1284, 2147483648
    %v1297 = vor.u32 1.1754944e-38, %v1296
    %v1298 = vsel %vm1295, %v1297, %v1293
    %v1299 = vmul.f32 1.0, %v1298
    %v1300 = vtanh.pop %v1280
    %v1301 = vmul.f32 %v1299, %v1222
    %1303 = vrot.lane.b32.xlu0 %v1300, 64
    %v1304 = vpop.permute.xlu0 %1303
    %v1306 = vmul.f32 %v1299, %v1304
    %1308 = vrot.lane.b32.xlu0 %v1306, 32
    %v1309 = vpop.permute.xlu0 %1308
    %v1311 = vadd.f32 %v1301, %v1309
    %v1312 = vtanh.pop %v1311
    %1314 = vrot.lane.b32.xlu0 %v1312, 64
    %v1315 = vpop.permute.xlu0 %1314
    %v1317 = vmul.f32 %v1299, %v1315
    %s1318 = scalar_lea.vmem [#allocation3], 32
    %v1319 = vld [vmem:[%s1318] sm:$0xff]
    %v1320 = vld [vmem:[%s1318 + $0x8] sm:$0xff]
    %v1321 = vld [vmem:[%s1318 + $0x10] sm:$0xff]
    %v1322 = vld [vmem:[%s1318 + $0x18] sm:$0xff]
    %s1323 = scalar_lea.vmem [#allocation5], 32
    %v1324 = vld [vmem:[%s1323] sm:$0xff]
    %v1325 = vld [vmem:[%s1323 + $0x8] sm:$0xff]
    %v1326 = vld [vmem:[%s1323 + $0x10] sm:$0xff]
    %v1327 = vld [vmem:[%s1323 + $0x18] sm:$0xff]
    %s1328 = scalar_lea.vmem %s6, 1
    %v1329 = vld [vmem:[%s1328] sm:$0x1]
    %v1331 = vperm.slane %v1329, 0
    %1333 = vmatpush.msra.mxu0 0.0
    %1334 = vmatpush.msra.mxu0 0.0
    %1335 = vmatpush.msra.mxu0 0.0
    %1336 = vmatpush.msra.mxu0 0.0
    %1337 = vmatpush.msra.mxu0 0.0
    %1338 = vmatpush.msra.mxu0 0.0
    %1339 = vmatpush.msra.mxu0 0.0
    %1340 = vmatpush.msra.mxu0 0.0
    %1341 = vmatpush.msra.mxu0 0.0
    %1342 = vmatpush.msra.mxu0 0.0
    %1343 = vmatpush.msra.mxu0 0.0
    %1344 = vmatpush.msra.mxu0 0.0
    %1345 = vmatpush.msra.mxu0 %v1322
    %1346 = vmatpush.msra.mxu0 %v1321
    %1347 = vmatpush.msra.mxu0 %v1320
    %1348 = vmatpush.msra.mxu0 %v1319
    %1349 = vmatmul.f32.gmra.mxu0 %v754
    %v1350 = vpop.f32.mrf.mxu0
    %v1351 = vadd.f32 %v1331, %v1350
    %1352 = vdwg.mxu0
    %1353 = vmatpush.msra.mxu0 0.0
    %1354 = vmatpush.msra.mxu0 0.0
    %1355 = vmatpush.msra.mxu0 0.0
    %1356 = vmatpush.msra.mxu0 0.0
    %1357 = vmatpush.msra.mxu0 0.0
    %1358 = vmatpush.msra.mxu0 0.0
    %1359 = vmatpush.msra.mxu0 0.0
    %1360 = vmatpush.msra.mxu0 0.0
    %1361 = vmatpush.msra.mxu0 0.0
    %1362 = vmatpush.msra.mxu0 0.0
    %1363 = vmatpush.msra.mxu0 0.0
    %1364 = vmatpush.msra.mxu0 0.0
    %1365 = vmatpush.msra.mxu0 %v1327
    %1366 = vmatpush.msra.mxu0 %v1326
    %1367 = vmatpush.msra.mxu0 %v1325
    %1368 = vmatpush.msra.mxu0 %v1324
    %1369 = vmatmul.f32.gmra.mxu0 %v96
    %v1370 = vpop.f32.mrf.mxu0
    %v1371 = vadd.f32 0.0, %v1370
    %1372 = vdwg.mxu0
    %v1373 = vadd.f32 %v1351, %v1371
    %v1374 = vxor.u32 %v1373, 2147483648
    %v1375 = vmul.f32 %v1374, 1.442695
    %v1376 = vpow.pop %v1375
    %v1377 = vadd.f32 %v1376, 1.0
    %v1378 = vrcp.pop %v1377
    %v1379 = vmul.f32 %v1377, %v1378
    %v1380 = vsub.f32 1.0, %v1379
    %v1381 = vmul.f32 %v1378, %v1380
    %v1382 = vadd.f32 %v1378, %v1381
    %vm1383 = vweird.f32 %v1377
    %vm1384 = vweird.f32 %v1378
    %vm1385 = vmor %vm1383, %vm1384
    %v1386 = vsel %vm1385, %v1378, %v1382
    %v1387 = vand.u32 2147483647, %v1377
    %vm1388 = vcmp.eq.f32.partialorder %v1387, 8.507059e+37
    %v1389 = vand.u32 %v1377, 2147483648
    %v1390 = vor.u32 1.1754944e-38, %v1389
    %v1391 = vsel %vm1388, %v1390, %v1386
    %v1392 = vmul.f32 1.0, %v1391
    %v1393 = vtanh.pop %v1373
    %v1394 = vmul.f32 %v1392, 0.0
    %1396 = vrot.lane.b32.xlu0 %v1393, 64
    %v1397 = vpop.permute.xlu0 %1396
    %v1399 = vmul.f32 %v1392, %v1397
    %1401 = vrot.lane.b32.xlu0 %v1399, 32
    %v1402 = vpop.permute.xlu0 %1401
    %v1404 = vadd.f32 %v1394, %v1402
    %v1405 = vtanh.pop %v1404
    %1407 = vrot.lane.b32.xlu0 %v1405, 64
    %v1408 = vpop.permute.xlu0 %1407
    %v1410 = vmul.f32 %v1392, %v1408
    %1411 = vmatpush.msra.mxu0 0.0
    %1412 = vmatpush.msra.mxu0 0.0
    %1413 = vmatpush.msra.mxu0 0.0
    %1414 = vmatpush.msra.mxu0 0.0
    %1415 = vmatpush.msra.mxu0 0.0
    %1416 = vmatpush.msra.mxu0 0.0
    %1417 = vmatpush.msra.mxu0 0.0
    %1418 = vmatpush.msra.mxu0 0.0
    %1419 = vmatpush.msra.mxu0 0.0
    %1420 = vmatpush.msra.mxu0 0.0
    %1421 = vmatpush.msra.mxu0 0.0
    %1422 = vmatpush.msra.mxu0 0.0
    %1423 = vmatpush.msra.mxu0 %v1322
    %1424 = vmatpush.msra.mxu0 %v1321
    %1425 = vmatpush.msra.mxu0 %v1320
    %1426 = vmatpush.msra.mxu0 %v1319
    %1427 = vmatmul.f32.gmra.mxu0 %v837
    %v1428 = vpop.f32.mrf.mxu0
    %v1429 = vadd.f32 %v1331, %v1428
    %1430 = vdwg.mxu0
    %1432 = vrot.lane.b32.xlu0 %v1410, 32
    %v1433 = vpop.permute.xlu0 %1432
    %v1434 = vsel %vm94, %v1433, 0
    %1436 = vmatpush.msra.mxu0 0.0
    %1437 = vmatpush.msra.mxu0 0.0
    %1438 = vmatpush.msra.mxu0 0.0
    %1439 = vmatpush.msra.mxu0 0.0
    %1440 = vmatpush.msra.mxu0 0.0
    %1441 = vmatpush.msra.mxu0 0.0
    %1442 = vmatpush.msra.mxu0 0.0
    %1443 = vmatpush.msra.mxu0 0.0
    %1444 = vmatpush.msra.mxu0 0.0
    %1445 = vmatpush.msra.mxu0 0.0
    %1446 = vmatpush.msra.mxu0 0.0
    %1447 = vmatpush.msra.mxu0 0.0
    %1448 = vmatpush.msra.mxu0 %v1327
    %1449 = vmatpush.msra.mxu0 %v1326
    %1450 = vmatpush.msra.mxu0 %v1325
    %1451 = vmatpush.msra.mxu0 %v1324
    %1452 = vmatmul.f32.gmra.mxu0 %v1434
    %v1453 = vpop.f32.mrf.mxu0
    %v1454 = vadd.f32 0.0, %v1453
    %1455 = vdwg.mxu0
    %v1456 = vadd.f32 %v1429, %v1454
    %v1457 = vxor.u32 %v1456, 2147483648
    %v1458 = vmul.f32 %v1457, 1.442695
    %v1459 = vpow.pop %v1458
    %v1460 = vadd.f32 %v1459, 1.0
    %v1461 = vrcp.pop %v1460
    %v1462 = vmul.f32 %v1460, %v1461
    %v1463 = vsub.f32 1.0, %v1462
    %v1464 = vmul.f32 %v1461, %v1463
    %v1465 = vadd.f32 %v1461, %v1464
    %vm1466 = vweird.f32 %v1460
    %vm1467 = vweird.f32 %v1461
    %vm1468 = vmor %vm1466, %vm1467
    %v1469 = vsel %vm1468, %v1461, %v1465
    %v1470 = vand.u32 2147483647, %v1460
    %vm1471 = vcmp.eq.f32.partialorder %v1470, 8.507059e+37
    %v1472 = vand.u32 %v1460, 2147483648
    %v1473 = vor.u32 1.1754944e-38, %v1472
    %v1474 = vsel %vm1471, %v1473, %v1469
    %v1475 = vmul.f32 1.0, %v1474
    %v1476 = vtanh.pop %v1456
    %v1477 = vmul.f32 %v1475, %v1404
    %1479 = vrot.lane.b32.xlu0 %v1476, 64
    %v1480 = vpop.permute.xlu0 %1479
    %v1482 = vmul.f32 %v1475, %v1480
    %1484 = vrot.lane.b32.xlu0 %v1482, 32
    %v1485 = vpop.permute.xlu0 %1484
    %v1487 = vadd.f32 %v1477, %v1485
    %v1488 = vtanh.pop %v1487
    %1490 = vrot.lane.b32.xlu0 %v1488, 64
    %v1491 = vpop.permute.xlu0 %1490
    %v1493 = vmul.f32 %v1475, %v1491
    %1494 = vmatpush.msra.mxu0 0.0
    %1495 = vmatpush.msra.mxu0 0.0
    %1496 = vmatpush.msra.mxu0 0.0
    %1497 = vmatpush.msra.mxu0 0.0
    %1498 = vmatpush.msra.mxu0 0.0
    %1499 = vmatpush.msra.mxu0 0.0
    %1500 = vmatpush.msra.mxu0 0.0
    %1501 = vmatpush.msra.mxu0 0.0
    %1502 = vmatpush.msra.mxu0 0.0
    %1503 = vmatpush.msra.mxu0 0.0
    %1504 = vmatpush.msra.mxu0 0.0
    %1505 = vmatpush.msra.mxu0 0.0
    %1506 = vmatpush.msra.mxu0 %v1322
    %1507 = vmatpush.msra.mxu0 %v1321
    %1508 = vmatpush.msra.mxu0 %v1320
    %1509 = vmatpush.msra.mxu0 %v1319
    %1510 = vmatmul.f32.gmra.mxu0 %v920
    %v1511 = vpop.f32.mrf.mxu0
    %v1512 = vadd.f32 %v1331, %v1511
    %1513 = vdwg.mxu0
    %1515 = vrot.lane.b32.xlu0 %v1493, 32
    %v1516 = vpop.permute.xlu0 %1515
    %v1517 = vsel %vm94, %v1516, 0
    %1519 = vmatpush.msra.mxu0 0.0
    %1520 = vmatpush.msra.mxu0 0.0
    %1521 = vmatpush.msra.mxu0 0.0
    %1522 = vmatpush.msra.mxu0 0.0
    %1523 = vmatpush.msra.mxu0 0.0
    %1524 = vmatpush.msra.mxu0 0.0
    %1525 = vmatpush.msra.mxu0 0.0
    %1526 = vmatpush.msra.mxu0 0.0
    %1527 = vmatpush.msra.mxu0 0.0
    %1528 = vmatpush.msra.mxu0 0.0
    %1529 = vmatpush.msra.mxu0 0.0
    %1530 = vmatpush.msra.mxu0 0.0
    %1531 = vmatpush.msra.mxu0 %v1327
    %1532 = vmatpush.msra.mxu0 %v1326
    %1533 = vmatpush.msra.mxu0 %v1325
    %1534 = vmatpush.msra.mxu0 %v1324
    %1535 = vmatmul.f32.gmra.mxu0 %v1517
    %v1536 = vpop.f32.mrf.mxu0
    %v1537 = vadd.f32 0.0, %v1536
    %1538 = vdwg.mxu0
    %v1539 = vadd.f32 %v1512, %v1537
    %v1540 = vxor.u32 %v1539, 2147483648
    %v1541 = vmul.f32 %v1540, 1.442695
    %v1542 = vpow.pop %v1541
    %v1543 = vadd.f32 %v1542, 1.0
    %v1544 = vrcp.pop %v1543
    %v1545 = vmul.f32 %v1543, %v1544
    %v1546 = vsub.f32 1.0, %v1545
    %v1547 = vmul.f32 %v1544, %v1546
    %v1548 = vadd.f32 %v1544, %v1547
    %vm1549 = vweird.f32 %v1543
    %vm1550 = vweird.f32 %v1544
    %vm1551 = vmor %vm1549, %vm1550
    %v1552 = vsel %vm1551, %v1544, %v1548
    %v1553 = vand.u32 2147483647, %v1543
    %vm1554 = vcmp.eq.f32.partialorder %v1553, 8.507059e+37
    %v1555 = vand.u32 %v1543, 2147483648
    %v1556 = vor.u32 1.1754944e-38, %v1555
    %v1557 = vsel %vm1554, %v1556, %v1552
    %v1558 = vmul.f32 1.0, %v1557
    %v1559 = vtanh.pop %v1539
    %v1560 = vmul.f32 %v1558, %v1487
    %1562 = vrot.lane.b32.xlu0 %v1559, 64
    %v1563 = vpop.permute.xlu0 %1562
    %v1565 = vmul.f32 %v1558, %v1563
    %1567 = vrot.lane.b32.xlu0 %v1565, 32
    %v1568 = vpop.permute.xlu0 %1567
    %v1570 = vadd.f32 %v1560, %v1568
    %v1571 = vtanh.pop %v1570
    %1573 = vrot.lane.b32.xlu0 %v1571, 64
    %v1574 = vpop.permute.xlu0 %1573
    %v1576 = vmul.f32 %v1558, %v1574
    %1577 = vmatpush.msra.mxu0 0.0
    %1578 = vmatpush.msra.mxu0 0.0
    %1579 = vmatpush.msra.mxu0 0.0
    %1580 = vmatpush.msra.mxu0 0.0
    %1581 = vmatpush.msra.mxu0 0.0
    %1582 = vmatpush.msra.mxu0 0.0
    %1583 = vmatpush.msra.mxu0 0.0
    %1584 = vmatpush.msra.mxu0 0.0
    %1585 = vmatpush.msra.mxu0 0.0
    %1586 = vmatpush.msra.mxu0 0.0
    %1587 = vmatpush.msra.mxu0 0.0
    %1588 = vmatpush.msra.mxu0 0.0
    %1589 = vmatpush.msra.mxu0 %v1322
    %1590 = vmatpush.msra.mxu0 %v1321
    %1591 = vmatpush.msra.mxu0 %v1320
    %1592 = vmatpush.msra.mxu0 %v1319
    %1593 = vmatmul.f32.gmra.mxu0 %v1003
    %v1594 = vpop.f32.mrf.mxu0
    %v1595 = vadd.f32 %v1331, %v1594
    %1596 = vdwg.mxu0
    %1598 = vrot.lane.b32.xlu0 %v1576, 32
    %v1599 = vpop.permute.xlu0 %1598
    %v1600 = vsel %vm94, %v1599, 0
    %1602 = vmatpush.msra.mxu0 0.0
    %1603 = vmatpush.msra.mxu0 0.0
    %1604 = vmatpush.msra.mxu0 0.0
    %1605 = vmatpush.msra.mxu0 0.0
    %1606 = vmatpush.msra.mxu0 0.0
    %1607 = vmatpush.msra.mxu0 0.0
    %1608 = vmatpush.msra.mxu0 0.0
    %1609 = vmatpush.msra.mxu0 0.0
    %1610 = vmatpush.msra.mxu0 0.0
    %1611 = vmatpush.msra.mxu0 0.0
    %1612 = vmatpush.msra.mxu0 0.0
    %1613 = vmatpush.msra.mxu0 0.0
    %1614 = vmatpush.msra.mxu0 %v1327
    %1615 = vmatpush.msra.mxu0 %v1326
    %1616 = vmatpush.msra.mxu0 %v1325
    %1617 = vmatpush.msra.mxu0 %v1324
    %1618 = vmatmul.f32.gmra.mxu0 %v1600
    %v1619 = vpop.f32.mrf.mxu0
    %v1620 = vadd.f32 0.0, %v1619
    %1621 = vdwg.mxu0
    %v1622 = vadd.f32 %v1595, %v1620
    %v1623 = vxor.u32 %v1622, 2147483648
    %v1624 = vmul.f32 %v1623, 1.442695
    %v1625 = vpow.pop %v1624
    %v1626 = vadd.f32 %v1625, 1.0
    %v1627 = vrcp.pop %v1626
    %v1628 = vmul.f32 %v1626, %v1627
    %v1629 = vsub.f32 1.0, %v1628
    %v1630 = vmul.f32 %v1627, %v1629
    %v1631 = vadd.f32 %v1627, %v1630
    %vm1632 = vweird.f32 %v1626
    %vm1633 = vweird.f32 %v1627
    %vm1634 = vmor %vm1632, %vm1633
    %v1635 = vsel %vm1634, %v1627, %v1631
    %v1636 = vand.u32 2147483647, %v1626
    %vm1637 = vcmp.eq.f32.partialorder %v1636, 8.507059e+37
    %v1638 = vand.u32 %v1626, 2147483648
    %v1639 = vor.u32 1.1754944e-38, %v1638
    %v1640 = vsel %vm1637, %v1639, %v1635
    %v1641 = vmul.f32 1.0, %v1640
    %v1642 = vtanh.pop %v1622
    %v1643 = vmul.f32 %v1641, %v1570
    %1645 = vrot.lane.b32.xlu0 %v1642, 64
    %v1646 = vpop.permute.xlu0 %1645
    %v1648 = vmul.f32 %v1641, %v1646
    %1650 = vrot.lane.b32.xlu0 %v1648, 32
    %v1651 = vpop.permute.xlu0 %1650
    %v1653 = vadd.f32 %v1643, %v1651
    %v1654 = vtanh.pop %v1653
    %1656 = vrot.lane.b32.xlu0 %v1654, 64
    %v1657 = vpop.permute.xlu0 %1656
    %v1659 = vmul.f32 %v1641, %v1657
    %1660 = vmatpush.msra.mxu0 0.0
    %1661 = vmatpush.msra.mxu0 0.0
    %1662 = vmatpush.msra.mxu0 0.0
    %1663 = vmatpush.msra.mxu0 0.0
    %1664 = vmatpush.msra.mxu0 0.0
    %1665 = vmatpush.msra.mxu0 0.0
    %1666 = vmatpush.msra.mxu0 0.0
    %1667 = vmatpush.msra.mxu0 0.0
    %1668 = vmatpush.msra.mxu0 0.0
    %1669 = vmatpush.msra.mxu0 0.0
    %1670 = vmatpush.msra.mxu0 0.0
    %1671 = vmatpush.msra.mxu0 0.0
    %1672 = vmatpush.msra.mxu0 %v1322
    %1673 = vmatpush.msra.mxu0 %v1321
    %1674 = vmatpush.msra.mxu0 %v1320
    %1675 = vmatpush.msra.mxu0 %v1319
    %1676 = vmatmul.f32.gmra.mxu0 %v1086
    %v1677 = vpop.f32.mrf.mxu0
    %v1678 = vadd.f32 %v1331, %v1677
    %1679 = vdwg.mxu0
    %1681 = vrot.lane.b32.xlu0 %v1659, 32
    %v1682 = vpop.permute.xlu0 %1681
    %v1683 = vsel %vm94, %v1682, 0
    %1685 = vmatpush.msra.mxu0 0.0
    %1686 = vmatpush.msra.mxu0 0.0
    %1687 = vmatpush.msra.mxu0 0.0
    %1688 = vmatpush.msra.mxu0 0.0
    %1689 = vmatpush.msra.mxu0 0.0
    %1690 = vmatpush.msra.mxu0 0.0
    %1691 = vmatpush.msra.mxu0 0.0
    %1692 = vmatpush.msra.mxu0 0.0
    %1693 = vmatpush.msra.mxu0 0.0
    %1694 = vmatpush.msra.mxu0 0.0
    %1695 = vmatpush.msra.mxu0 0.0
    %1696 = vmatpush.msra.mxu0 0.0
    %1697 = vmatpush.msra.mxu0 %v1327
    %1698 = vmatpush.msra.mxu0 %v1326
    %1699 = vmatpush.msra.mxu0 %v1325
    %1700 = vmatpush.msra.mxu0 %v1324
    %1701 = vmatmul.f32.gmra.mxu0 %v1683
    %v1702 = vpop.f32.mrf.mxu0
    %v1703 = vadd.f32 0.0, %v1702
    %1704 = vdwg.mxu0
    %v1705 = vadd.f32 %v1678, %v1703
    %v1706 = vxor.u32 %v1705, 2147483648
    %v1707 = vmul.f32 %v1706, 1.442695
    %v1708 = vpow.pop %v1707
    %v1709 = vadd.f32 %v1708, 1.0
    %v1710 = vrcp.pop %v1709
    %v1711 = vmul.f32 %v1709, %v1710
    %v1712 = vsub.f32 1.0, %v1711
    %v1713 = vmul.f32 %v1710, %v1712
    %v1714 = vadd.f32 %v1710, %v1713
    %vm1715 = vweird.f32 %v1709
    %vm1716 = vweird.f32 %v1710
    %vm1717 = vmor %vm1715, %vm1716
    %v1718 = vsel %vm1717, %v1710, %v1714
    %v1719 = vand.u32 2147483647, %v1709
    %vm1720 = vcmp.eq.f32.partialorder %v1719, 8.507059e+37
    %v1721 = vand.u32 %v1709, 2147483648
    %v1722 = vor.u32 1.1754944e-38, %v1721
    %v1723 = vsel %vm1720, %v1722, %v1718
    %v1724 = vmul.f32 1.0, %v1723
    %v1725 = vtanh.pop %v1705
    %v1726 = vmul.f32 %v1724, %v1653
    %1728 = vrot.lane.b32.xlu0 %v1725, 64
    %v1729 = vpop.permute.xlu0 %1728
    %v1731 = vmul.f32 %v1724, %v1729
    %1733 = vrot.lane.b32.xlu0 %v1731, 32
    %v1734 = vpop.permute.xlu0 %1733
    %v1736 = vadd.f32 %v1726, %v1734
    %v1737 = vtanh.pop %v1736
    %1739 = vrot.lane.b32.xlu0 %v1737, 64
    %v1740 = vpop.permute.xlu0 %1739
    %v1742 = vmul.f32 %v1724, %v1740
    %1743 = vmatpush.msra.mxu0 0.0
    %1744 = vmatpush.msra.mxu0 0.0
    %1745 = vmatpush.msra.mxu0 0.0
    %1746 = vmatpush.msra.mxu0 0.0
    %1747 = vmatpush.msra.mxu0 0.0
    %1748 = vmatpush.msra.mxu0 0.0
    %1749 = vmatpush.msra.mxu0 0.0
    %1750 = vmatpush.msra.mxu0 0.0
    %1751 = vmatpush.msra.mxu0 0.0
    %1752 = vmatpush.msra.mxu0 0.0
    %1753 = vmatpush.msra.mxu0 0.0
    %1754 = vmatpush.msra.mxu0 0.0
    %1755 = vmatpush.msra.mxu0 %v1322
    %1756 = vmatpush.msra.mxu0 %v1321
    %1757 = vmatpush.msra.mxu0 %v1320
    %1758 = vmatpush.msra.mxu0 %v1319
    %1759 = vmatmul.f32.gmra.mxu0 %v1169
    %v1760 = vpop.f32.mrf.mxu0
    %v1761 = vadd.f32 %v1331, %v1760
    %1762 = vdwg.mxu0
    %1764 = vrot.lane.b32.xlu0 %v1742, 32
    %v1765 = vpop.permute.xlu0 %1764
    %v1766 = vsel %vm94, %v1765, 0
    %1768 = vmatpush.msra.mxu0 0.0
    %1769 = vmatpush.msra.mxu0 0.0
    %1770 = vmatpush.msra.mxu0 0.0
    %1771 = vmatpush.msra.mxu0 0.0
    %1772 = vmatpush.msra.mxu0 0.0
    %1773 = vmatpush.msra.mxu0 0.0
    %1774 = vmatpush.msra.mxu0 0.0
    %1775 = vmatpush.msra.mxu0 0.0
    %1776 = vmatpush.msra.mxu0 0.0
    %1777 = vmatpush.msra.mxu0 0.0
    %1778 = vmatpush.msra.mxu0 0.0
    %1779 = vmatpush.msra.mxu0 0.0
    %1780 = vmatpush.msra.mxu0 %v1327
    %1781 = vmatpush.msra.mxu0 %v1326
    %1782 = vmatpush.msra.mxu0 %v1325
    %1783 = vmatpush.msra.mxu0 %v1324
    %1784 = vmatmul.f32.gmra.mxu0 %v1766
    %v1785 = vpop.f32.mrf.mxu0
    %v1786 = vadd.f32 0.0, %v1785
    %1787 = vdwg.mxu0
    %v1788 = vadd.f32 %v1761, %v1786
    %v1789 = vxor.u32 %v1788, 2147483648
    %v1790 = vmul.f32 %v1789, 1.442695
    %v1791 = vpow.pop %v1790
    %v1792 = vadd.f32 %v1791, 1.0
    %v1793 = vrcp.pop %v1792
    %v1794 = vmul.f32 %v1792, %v1793
    %v1795 = vsub.f32 1.0, %v1794
    %v1796 = vmul.f32 %v1793, %v1795
    %v1797 = vadd.f32 %v1793, %v1796
    %vm1798 = vweird.f32 %v1792
    %vm1799 = vweird.f32 %v1793
    %vm1800 = vmor %vm1798, %vm1799
    %v1801 = vsel %vm1800, %v1793, %v1797
    %v1802 = vand.u32 2147483647, %v1792
    %vm1803 = vcmp.eq.f32.partialorder %v1802, 8.507059e+37
    %v1804 = vand.u32 %v1792, 2147483648
    %v1805 = vor.u32 1.1754944e-38, %v1804
    %v1806 = vsel %vm1803, %v1805, %v1801
    %v1807 = vmul.f32 1.0, %v1806
    %v1808 = vtanh.pop %v1788
    %v1809 = vmul.f32 %v1807, %v1736
    %1811 = vrot.lane.b32.xlu0 %v1808, 64
    %v1812 = vpop.permute.xlu0 %1811
    %v1814 = vmul.f32 %v1807, %v1812
    %1816 = vrot.lane.b32.xlu0 %v1814, 32
    %v1817 = vpop.permute.xlu0 %1816
    %v1819 = vadd.f32 %v1809, %v1817
    %v1820 = vtanh.pop %v1819
    %1822 = vrot.lane.b32.xlu0 %v1820, 64
    %v1823 = vpop.permute.xlu0 %1822
    %v1825 = vmul.f32 %v1807, %v1823
    %1826 = vmatpush.msra.mxu0 0.0
    %1827 = vmatpush.msra.mxu0 0.0
    %1828 = vmatpush.msra.mxu0 0.0
    %1829 = vmatpush.msra.mxu0 0.0
    %1830 = vmatpush.msra.mxu0 0.0
    %1831 = vmatpush.msra.mxu0 0.0
    %1832 = vmatpush.msra.mxu0 0.0
    %1833 = vmatpush.msra.mxu0 0.0
    %1834 = vmatpush.msra.mxu0 0.0
    %1835 = vmatpush.msra.mxu0 0.0
    %1836 = vmatpush.msra.mxu0 0.0
    %1837 = vmatpush.msra.mxu0 0.0
    %1838 = vmatpush.msra.mxu0 %v1322
    %1839 = vmatpush.msra.mxu0 %v1321
    %1840 = vmatpush.msra.mxu0 %v1320
    %1841 = vmatpush.msra.mxu0 %v1319
    %1842 = vmatmul.f32.gmra.mxu0 %v1258
    %v1843 = vpop.f32.mrf.mxu0
    %v1844 = vadd.f32 %v1331, %v1843
    %1845 = vdwg.mxu0
    %1847 = vrot.lane.b32.xlu0 %v1825, 32
    %v1848 = vpop.permute.xlu0 %1847
    %v1849 = vsel %vm94, %v1848, 0
    %1851 = vmatpush.msra.mxu0 0.0
    %1852 = vmatpush.msra.mxu0 0.0
    %1853 = vmatpush.msra.mxu0 0.0
    %1854 = vmatpush.msra.mxu0 0.0
    %1855 = vmatpush.msra.mxu0 0.0
    %1856 = vmatpush.msra.mxu0 0.0
    %1857 = vmatpush.msra.mxu0 0.0
    %1858 = vmatpush.msra.mxu0 0.0
    %1859 = vmatpush.msra.mxu0 0.0
    %1860 = vmatpush.msra.mxu0 0.0
    %1861 = vmatpush.msra.mxu0 0.0
    %1862 = vmatpush.msra.mxu0 0.0
    %1863 = vmatpush.msra.mxu0 %v1327
    %1864 = vmatpush.msra.mxu0 %v1326
    %1865 = vmatpush.msra.mxu0 %v1325
    %1866 = vmatpush.msra.mxu0 %v1324
    %1867 = vmatmul.f32.gmra.mxu0 %v1849
    %v1868 = vpop.f32.mrf.mxu0
    %v1869 = vadd.f32 0.0, %v1868
    %1870 = vdwg.mxu0
    %v1871 = vadd.f32 %v1844, %v1869
    %v1872 = vxor.u32 %v1871, 2147483648
    %v1873 = vmul.f32 %v1872, 1.442695
    %v1874 = vpow.pop %v1873
    %v1875 = vadd.f32 %v1874, 1.0
    %v1876 = vrcp.pop %v1875
    %v1877 = vmul.f32 %v1875, %v1876
    %v1878 = vsub.f32 1.0, %v1877
    %v1879 = vmul.f32 %v1876, %v1878
    %v1880 = vadd.f32 %v1876, %v1879
    %vm1881 = vweird.f32 %v1875
    %vm1882 = vweird.f32 %v1876
    %vm1883 = vmor %vm1881, %vm1882
    %v1884 = vsel %vm1883, %v1876, %v1880
    %v1885 = vand.u32 2147483647, %v1875
    %vm1886 = vcmp.eq.f32.partialorder %v1885, 8.507059e+37
    %v1887 = vand.u32 %v1875, 2147483648
    %v1888 = vor.u32 1.1754944e-38, %v1887
    %v1889 = vsel %vm1886, %v1888, %v1884
    %v1890 = vmul.f32 1.0, %v1889
    %v1891 = vtanh.pop %v1871
    %v1892 = vmul.f32 %v1890, %v1819
    %1894 = vrot.lane.b32.xlu0 %v1891, 64
    %v1895 = vpop.permute.xlu0 %1894
    %v1897 = vmul.f32 %v1890, %v1895
    %1899 = vrot.lane.b32.xlu0 %v1897, 32
    %v1900 = vpop.permute.xlu0 %1899
    %v1902 = vadd.f32 %v1892, %v1900
    %v1903 = vtanh.pop %v1902
    %1905 = vrot.lane.b32.xlu0 %v1903, 64
    %v1906 = vpop.permute.xlu0 %1905
    %v1908 = vmul.f32 %v1890, %v1906
    %1910 = vrot.lane.b32.xlu0 %v1317, 32
    %v1911 = vpop.permute.xlu0 %1910
    %v1912 = vsel %vm94, %v1911, 0
    %1914 = vmatpush.msra.mxu0 0.0
    %1915 = vmatpush.msra.mxu0 0.0
    %1916 = vmatpush.msra.mxu0 0.0
    %1917 = vmatpush.msra.mxu0 0.0
    %1918 = vmatpush.msra.mxu0 0.0
    %1919 = vmatpush.msra.mxu0 0.0
    %1920 = vmatpush.msra.mxu0 0.0
    %1921 = vmatpush.msra.mxu0 0.0
    %1922 = vmatpush.msra.mxu0 0.0
    %1923 = vmatpush.msra.mxu0 0.0
    %1924 = vmatpush.msra.mxu0 0.0
    %1925 = vmatpush.msra.mxu0 0.0
    %1926 = vmatpush.msra.mxu0 %v1322
    %1927 = vmatpush.msra.mxu0 %v1321
    %1928 = vmatpush.msra.mxu0 %v1320
    %1929 = vmatpush.msra.mxu0 %v1319
    %1930 = vmatmul.f32.gmra.mxu0 %v1912
    %v1931 = vpop.f32.mrf.mxu0
    %v1932 = vadd.f32 %v1331, %v1931
    %1933 = vdwg.mxu0
    %1935 = vrot.lane.b32.xlu0 %v1908, 32
    %v1936 = vpop.permute.xlu0 %1935
    %v1937 = vsel %vm94, %v1936, 0
    %1939 = vmatpush.msra.mxu0 0.0
    %1940 = vmatpush.msra.mxu0 0.0
    %1941 = vmatpush.msra.mxu0 0.0
    %1942 = vmatpush.msra.mxu0 0.0
    %1943 = vmatpush.msra.mxu0 0.0
    %1944 = vmatpush.msra.mxu0 0.0
    %1945 = vmatpush.msra.mxu0 0.0
    %1946 = vmatpush.msra.mxu0 0.0
    %1947 = vmatpush.msra.mxu0 0.0
    %1948 = vmatpush.msra.mxu0 0.0
    %1949 = vmatpush.msra.mxu0 0.0
    %1950 = vmatpush.msra.mxu0 0.0
    %1951 = vmatpush.msra.mxu0 %v1327
    %1952 = vmatpush.msra.mxu0 %v1326
    %1953 = vmatpush.msra.mxu0 %v1325
    %1954 = vmatpush.msra.mxu0 %v1324
    %1955 = vmatmul.f32.gmra.mxu0 %v1937
    %v1956 = vpop.f32.mrf.mxu0
    %v1957 = vadd.f32 0.0, %v1956
    %1958 = vdwg.mxu0
    %v1959 = vadd.f32 %v1932, %v1957
    %v1960 = vxor.u32 %v1959, 2147483648
    %v1961 = vmul.f32 %v1960, 1.442695
    %v1962 = vpow.pop %v1961
    %v1963 = vadd.f32 %v1962, 1.0
    %v1964 = vrcp.pop %v1963
    %v1965 = vmul.f32 %v1963, %v1964
    %v1966 = vsub.f32 1.0, %v1965
    %v1967 = vmul.f32 %v1964, %v1966
    %v1968 = vadd.f32 %v1964, %v1967
    %vm1969 = vweird.f32 %v1963
    %vm1970 = vweird.f32 %v1964
    %vm1971 = vmor %vm1969, %vm1970
    %v1972 = vsel %vm1971, %v1964, %v1968
    %v1973 = vand.u32 2147483647, %v1963
    %vm1974 = vcmp.eq.f32.partialorder %v1973, 8.507059e+37
    %v1975 = vand.u32 %v1963, 2147483648
    %v1976 = vor.u32 1.1754944e-38, %v1975
    %v1977 = vsel %vm1974, %v1976, %v1972
    %v1978 = vmul.f32 1.0, %v1977
    %v1979 = vtanh.pop %v1959
    %v1980 = vmul.f32 %v1978, %v1902
    %1982 = vrot.lane.b32.xlu0 %v1979, 64
    %v1983 = vpop.permute.xlu0 %1982
    %v1985 = vmul.f32 %v1978, %v1983
    %1987 = vrot.lane.b32.xlu0 %v1985, 32
    %v1988 = vpop.permute.xlu0 %1987
    %v1990 = vadd.f32 %v1980, %v1988
    %v1991 = vtanh.pop %v1990
    %1993 = vrot.lane.b32.xlu0 %v1991, 64
    %v1994 = vpop.permute.xlu0 %1993
    %v1996 = vmul.f32 %v1978, %v1994
    %v1997 = vld [vmem:[%s7] sm:$0xff]
    %v1998 = vld [vmem:[%s7 + $0x8] sm:$0xff]
    %v1999 = vld [vmem:[%s7 + $0x10] sm:$0xff]
    %v2000 = vld [vmem:[%s7 + $0x18] sm:$0xff]
    %v2001 = vld [vmem:[#allocation2] sm:$0x1]
    %v2003 = vperm.slane %v2001, 0
    %2006 = vrot.lane.b32.xlu0 %v1996, 32
    %v2007 = vpop.permute.xlu0 %2006
    %v2008 = vsel %vm94, %v2007, 0
    %2010 = vmatpush.msra.mxu0 0.0
    %2011 = vmatpush.msra.mxu0 0.0
    %2012 = vmatpush.msra.mxu0 0.0
    %2013 = vmatpush.msra.mxu0 0.0
    %2014 = vmatpush.msra.mxu0 0.0
    %2015 = vmatpush.msra.mxu0 0.0
    %2016 = vmatpush.msra.mxu0 0.0
    %2017 = vmatpush.msra.mxu0 0.0
    %2018 = vmatpush.msra.mxu0 0.0
    %2019 = vmatpush.msra.mxu0 0.0
    %2020 = vmatpush.msra.mxu0 0.0
    %2021 = vmatpush.msra.mxu0 0.0
    %2022 = vmatpush.msra.mxu0 %v2000
    %2023 = vmatpush.msra.mxu0 %v1999
    %2024 = vmatpush.msra.mxu0 %v1998
    %2025 = vmatpush.msra.mxu0 %v1997
    %2026 = vmatmul.f32.gmra.mxu0 %v2008
    %v2027 = vpop.f32.mrf.mxu0
    %v2028 = vadd.f32 %v2003, %v2027
    %2029 = vdwg.mxu0
    %vm2030 = vcmask 1024
    %2031 = vst.msk [vmem:[%s9] sm:$0x3] %vm2030, %v2028
    // Predicated region
    $region46: #{tpu_custom_call.1} parent=1 // pred_check
      _
    $region47: #{tpu_custom_call.1} parent=1 // pred_check_branch
      %2033 = sbr.rel (0) target = $region49
    $region48: #{tpu_custom_call.1} parent=1 // pred_region
      _
    $region49: #{tpu_custom_call.1} parent=1 // pred_fallthru
      _
    // Predicated region
    $region50: #{tpu_custom_call.1} parent=1 // pred_check
      _
    $region51: #{tpu_custom_call.1} parent=1 // pred_check_branch
      %2035 = sbr.rel (0) target = $region53
    $region52: #{tpu_custom_call.1} parent=1 // pred_region
      _
    $region53: #{tpu_custom_call.1} parent=1 // pred_fallthru
      _
    %2036 = vsyncpa [#allocation4], 1
    %2037 = vsyncpa [#allocation6], 1

</llo_original>
